<compile_context>
chip_gen: v7x
topology: tpu7x:2x2x1
jax: 0.10.0
libtpu: 0.0.40
codegen_flags: <defaults>
</compile_context>

<pallas_src>
import functools

import jax
import jax.numpy as jnp
import numpy as np
from jax.experimental import pallas as pl
from jax.experimental.pallas import tpu as pltpu

_EPS = 1e-5  # nn.InstanceNorm1d default


# --------------------------------------------------------------------------- #
# Shared in-kernel math
# --------------------------------------------------------------------------- #
def _attention_over_batch(qp, kp, vp, approx_recip):
    """Softmax attention across the *batch* axis, independently per point.

    qp/kp/vp: (B, TN, D) f32.  Returns attn: (B, TN, D) f32.
    B is small (module is used with a handful of batch elements), so the
    per-key loops are a few VALU/XLU ops, not a matmul.
    """
    B = qp.shape[0]
    # Stacked (B, B, TN) scores -> single max / exp / sum (no (B,B,TN,D) temp).
    scores = jnp.stack(
        [jnp.sum(qp * kp[j][None], axis=-1) for j in range(B)], axis=1)
    m = jnp.max(scores, axis=1, keepdims=True)
    p = jnp.exp(scores - m)
    denom = jnp.sum(p, axis=1, keepdims=True)
    if approx_recip:
        inv = pl.reciprocal(denom, approx=True)      # EUP slot, ~free
    else:
        inv = 1.0 / denom
    p = p * inv                                      # (B, B, TN)
    attn = p[:, 0, :, None] * vp[0][None]
    for j in range(1, B):
        attn = attn + p[:, j, :, None] * vp[j][None]
    return attn                                      # (B, TN, D)


def _project_and_attend(x, w_big, b_big, w_tail, b1c, approx_recip):
    """x (B,TN,D) f32 -> y1_pre (B,TN,2D) f32 (pre-InstanceNorm)."""
    B, TN, D = x.shape
    R = B * TN
    xb = x.reshape(R, D).astype(jnp.bfloat16)

    # One MXU pass: [qp | kp | vp] = x @ W_big + b_big
    # (projection_{q,k,v} ∘ MHA in_proj composed host-side, scale folded in).
    proj = (jnp.dot(xb, w_big, preferred_element_type=jnp.float32) + b_big)
    qp = proj[:, 0 * D:1 * D].reshape(B, TN, D)
    kp = proj[:, 1 * D:2 * D].reshape(B, TN, D)
    vp = proj[:, 2 * D:3 * D].reshape(B, TN, D)

    attn = _attention_over_batch(qp, kp, vp, approx_recip)

    # Merged tail matmul: y1 = [x | attn] @ vstack([wq^T·W1a, Wout^T·Wm^T·W1b]) + b
    cat = jnp.concatenate(
        [xb, attn.reshape(R, D).astype(jnp.bfloat16)], axis=-1)     # (R, 2D)
    y1 = (jnp.dot(cat, w_tail, preferred_element_type=jnp.float32) + b1c)
    return y1.reshape(B, TN, 2 * D)


# --------------------------------------------------------------------------- #
# Fused single-kernel path (whole problem VMEM-resident)
# --------------------------------------------------------------------------- #
def _fused_kernel(x_ref, res_ref, wbig_ref, bbig_ref, wtail_ref, b1c_ref,
                  w2_ref, b2_ref, o_ref, *, approx_recip):
    B, N, D = x_ref.shape

    y1 = _project_and_attend(x_ref[...], wbig_ref[...], bbig_ref[...],
                             wtail_ref[...], b1c_ref[...], approx_recip)

    # InstanceNorm1d over the point axis: exact, centered, f32 (no partial stats).
    mu1 = jnp.mean(y1, axis=1, keepdims=True)
    c1 = y1 - mu1
    var1 = jnp.mean(c1 * c1, axis=1, keepdims=True)
    y1n = jnp.maximum(c1 * jax.lax.rsqrt(var1 + _EPS), 0.0)

    y2 = (jnp.dot(y1n.reshape(B * N, 2 * D).astype(jnp.bfloat16), w2_ref[...],
                  preferred_element_type=jnp.float32)
          + b2_ref[...]).reshape(B, N, D)
    mu2 = jnp.mean(y2, axis=1, keepdims=True)
    c2 = y2 - mu2
    var2 = jnp.mean(c2 * c2, axis=1, keepdims=True)
    y2n = jnp.maximum(c2 * jax.lax.rsqrt(var2 + _EPS), 0.0)

    o_ref[...] = res_ref[...] + y2n


# --------------------------------------------------------------------------- #
# Tiled 3-stage fallback path (large num_pts)
# --------------------------------------------------------------------------- #
def _stage1_kernel(x_ref, wbig_ref, bbig_ref, wtail_ref, b1c_ref,
                   y1_ref, s_ref, ss_ref, *, approx_recip):
    """Fused projections + attention + merged final_message conv-1 (pre-norm)."""
    y1 = _project_and_attend(x_ref[...], wbig_ref[...], bbig_ref[...],
                             wtail_ref[...], b1c_ref[...], approx_recip)
    y1b = y1.astype(y1_ref.dtype)
    y1_ref[...] = y1b
    # Per-tile partial InstanceNorm-1 stats, computed from the SAME bf16-rounded
    # values that are stored (keeps normalization consistent with what stage 2
    # reads back).  Finished outside the kernel; variance is clamped >= 0.
    y1s = y1b.astype(jnp.float32)
    s_ref[...] = jnp.sum(y1s, axis=1)[None]
    ss_ref[...] = jnp.sum(y1s * y1s, axis=1)[None]


def _stage2_kernel(y1_ref, mean1_ref, rstd1_ref, w2_ref, b2_ref,
                   y2_ref, s_ref, ss_ref):
    """InstanceNorm1 + ReLU + final_message conv-2 (pre-norm) + partial stats2."""
    B, TN, C2 = y1_ref.shape
    D = w2_ref.shape[1]
    y1 = jnp.maximum((y1_ref[...].astype(jnp.float32) - mean1_ref[...])
                     * rstd1_ref[...], 0.0)
    y2 = (jnp.dot(y1.reshape(B * TN, C2).astype(jnp.bfloat16), w2_ref[...],
                  preferred_element_type=jnp.float32)
          + b2_ref[...]).reshape(B, TN, D)
    y2b = y2.astype(y2_ref.dtype)
    y2_ref[...] = y2b
    y2s = y2b.astype(jnp.float32)
    s_ref[...] = jnp.sum(y2s, axis=1)[None]
    ss_ref[...] = jnp.sum(y2s * y2s, axis=1)[None]


def _stage3_kernel(y2_ref, res_ref, mean2_ref, rstd2_ref, o_ref):
    """InstanceNorm2 + ReLU + residual add."""
    y2 = jnp.maximum((y2_ref[...].astype(jnp.float32) - mean2_ref[...])
                     * rstd2_ref[...], 0.0)
    o_ref[...] = res_ref[...] + y2


# --------------------------------------------------------------------------- #
# Host-side helpers
# --------------------------------------------------------------------------- #
def _vmem_budget_bytes():
    """Generation-aware scoped-VMEM budget (v7x has half the VMEM of v5e/v6e)."""
    try:
        cap = int(pltpu.get_tpu_info().vmem_capacity_bytes)
    except Exception:  # noqa: BLE001 - conservative (v7x-sized) fallback
        cap = 64 * 1024 * 1024
    return min(cap // 2, 64 * 1024 * 1024)


def _fused_workset_bytes(B, N, D):
    """Conservative bound on live f32 temporaries inside the fused kernel."""
    return 4 * B * N * (24 * D + 4 * B) + 4 * 32 * D * D


def _pick_tile_n(B, N, D, budget):
    """Largest point-tile that divides N, fits the VMEM budget and keeps >= 2
    grid steps on the parallel axis (so both v7x TensorCores get work)."""
    if N % 8 != 0:
        raise NotImplementedError(
            "TODO(synk): pad/mask a point axis not divisible by 8")
    # Stage-1 per-tile live bytes ~ 64 * (B*tile_n) * D (f32 temporaries plus
    # double-buffered I/O blocks); keep well under the scoped VMEM limit.
    cap_rows = max(8, int(budget * 0.4) // (64 * B * D))
    max_tile = min(N, 4096, cap_rows)
    if N >= 16:
        max_tile = min(max_tile, N // 2)   # >= 2 grid steps for v7x megacore
    max_tile = max(8, (max_tile // 8) * 8)
    best = 8
    for t in range(8, max_tile + 1, 8):
        if N % t == 0:
            best = t
    return best


def _resident(arr):
    """BlockSpec keeping a small array fully resident across the grid."""
    zeros = (0,) * arr.ndim
    return pl.BlockSpec(arr.shape, lambda *_: zeros)


def _prepare_weights(params, num_heads):
    """Host-side weight composition (f32), then cast matmul weights to bf16."""
    D = params["wq"].shape[0]
    scale = 1.0 / np.sqrt(D // num_heads)
    wiq, wik, wiv = jnp.split(params["w_in"], 3, axis=0)
    biq, bik, biv = jnp.split(params["b_in"], 3)

    wqT, wkT, wvT = params["wq"].T, params["wk"].T, params["wv"].T
    # projection ∘ MHA in_proj composed; 1/sqrt(d) folded into the query branch.
    w_qp = (wqT @ wiq.T) * scale
    b_qp = (params["bq"] @ wiq.T + biq) * scale
    w_kp = wkT @ wik.T
    b_kp = params["bk"] @ wik.T + bik
    w_vp = wvT @ wiv.T
    b_vp = params["bv"] @ wiv.T + biv
    w_big = jnp.concatenate([w_qp, w_kp, w_vp], axis=1)            # (D, 3D)
    b_big = jnp.concatenate([b_qp, b_kp, b_vp])[None]              # (1, 3D)

    w1T = params["w1"].T                                           # (2D, 2D)
    w1a, w1b = w1T[:D], w1T[D:]
    # projection_q ∘ W1a folded (q never materialized) and
    # out_proj ∘ multihead_message ∘ W1b composed; merged into one tail weight.
    w_x1 = wqT @ w1a                                               # (D, 2D)
    w_av = params["wout"].T @ params["wm"].T @ w1b                 # (D, 2D)
    w_tail = jnp.concatenate([w_x1, w_av], axis=0)                 # (2D, 2D)
    b1c = (params["bq"] @ w1a
           + (params["bout"] @ params["wm"].T + params["bm"]) @ w1b
           + params["b1"])[None]                                   # (1, 2D)

    w2T = params["w2"].T                                           # (2D, D)
    b2 = params["b2"][None]

    bf = lambda w: w.astype(jnp.bfloat16)                          # noqa: E731
    return bf(w_big), b_big, bf(w_tail), b1c, bf(w2T), b2


# --------------------------------------------------------------------------- #
# Forward wrappers
# --------------------------------------------------------------------------- #
def _fused_forward(feature, residual, w_big, b_big, w_tail, b1c, w2t, b2, *,
                   budget, approx_recip):
    B, N, D = feature.shape
    kern = functools.partial(_fused_kernel, approx_recip=approx_recip)
    # grid=(): every operand is a single whole-array VMEM block; the only HBM
    # traffic is reading x / residual once and writing the output once.
    return pl.pallas_call(
        kern,
        out_shape=jax.ShapeDtypeStruct((B, N, D), jnp.float32),
        compiler_params=pltpu.CompilerParams(vmem_limit_bytes=budget),
    )(feature, residual, w_big, b_big, w_tail, b1c, w2t, b2)


def _tiled_forward(feature, residual, w_big, b_big, w_tail, b1c, w2t, b2, *,
                   budget, tile_n, approx_recip):
    B, N, D = feature.shape
    if tile_n is None:
        tile_n = _pick_tile_n(B, N, D, budget)
    assert N % tile_n == 0 and tile_n % 8 == 0, \
        "tile_n must be a multiple of 8 dividing N"
    num_tiles = N // tile_n

    cparams = pltpu.CompilerParams(
        dimension_semantics=("parallel",),        # megacore sharding on v7x
        vmem_limit_bytes=budget)

    # ---- Stage 1: projections + attention + merged final_message[0] ----------
    stage1 = functools.partial(_stage1_kernel, approx_recip=approx_recip)
    y1_pre, s1, ss1 = pl.pallas_call(
        stage1,
        grid=(num_tiles,),
        in_specs=[
            pl.BlockSpec((B, tile_n, D), lambda i: (0, i, 0)),
            _resident(w_big), _resident(b_big),
            _resident(w_tail), _resident(b1c),
        ],
        out_specs=(
            pl.BlockSpec((B, tile_n, 2 * D), lambda i: (0, i, 0)),
            pl.BlockSpec((1, B, 2 * D), lambda i: (i, 0, 0)),
            pl.BlockSpec((1, B, 2 * D), lambda i: (i, 0, 0)),
        ),
        out_shape=(
            jax.ShapeDtypeStruct((B, N, 2 * D), jnp.bfloat16),
            jax.ShapeDtypeStruct((num_tiles, B, 2 * D), jnp.float32),
            jax.ShapeDtypeStruct((num_tiles, B, 2 * D), jnp.float32),
        ),
        compiler_params=cparams,
    )(feature, w_big, b_big, w_tail, b1c)

    inv_n = 1.0 / N
    mean1 = jnp.sum(s1, axis=0) * inv_n                             # (B, 2D)
    var1 = jnp.maximum(jnp.sum(ss1, axis=0) * inv_n - mean1 * mean1, 0.0)
    rstd1 = jax.lax.rsqrt(var1 + _EPS)
    mean1, rstd1 = mean1[:, None, :], rstd1[:, None, :]             # (B, 1, 2D)

    # ---- Stage 2: IN1 + ReLU + final_message[3] (pre-norm) -------------------
    y2_pre, s2, ss2 = pl.pallas_call(
        _stage2_kernel,
        grid=(num_tiles,),
        in_specs=[
            pl.BlockSpec((B, tile_n, 2 * D), lambda i: (0, i, 0)),
            _resident(mean1), _resident(rstd1),
            _resident(w2t), _resident(b2),
        ],
        out_specs=(
            pl.BlockSpec((B, tile_n, D), lambda i: (0, i, 0)),
            pl.BlockSpec((1, B, D), lambda i: (i, 0, 0)),
            pl.BlockSpec((1, B, D), lambda i: (i, 0, 0)),
        ),
        out_shape=(
            jax.ShapeDtypeStruct((B, N, D), jnp.bfloat16),
            jax.ShapeDtypeStruct((num_tiles, B, D), jnp.float32),
            jax.ShapeDtypeStruct((num_tiles, B, D), jnp.float32),
        ),
        compiler_params=cparams,
    )(y1_pre, mean1, rstd1, w2t, b2)

    mean2 = jnp.sum(s2, axis=0) * inv_n                             # (B, D)
    var2 = jnp.maximum(jnp.sum(ss2, axis=0) * inv_n - mean2 * mean2, 0.0)
    rstd2 = jax.lax.rsqrt(var2 + _EPS)
    mean2, rstd2 = mean2[:, None, :], rstd2[:, None, :]             # (B, 1, D)

    # ---- Stage 3: IN2 + ReLU + residual add ----------------------------------
    # TODO(synk): consider pipeline_mode=pl.Buffered(3) here on v6e (pure
    #             elementwise stage, lowest arithmetic intensity).
    out = pl.pallas_call(
        _stage3_kernel,
        grid=(num_tiles,),
        in_specs=[
            pl.BlockSpec((B, tile_n, D), lambda i: (0, i, 0)),   # y2_pre (bf16)
            pl.BlockSpec((B, tile_n, D), lambda i: (0, i, 0)),   # residual
            _resident(mean2), _resident(rstd2),
        ],
        out_specs=pl.BlockSpec((B, tile_n, D), lambda i: (0, i, 0)),
        out_shape=jax.ShapeDtypeStruct((B, N, D), jnp.float32),
        compiler_params=cparams,
    )(y2_pre, residual, mean2, rstd2)
    return out


def attention_block_forward(params, feature, opposite_feature=None, *,
                            num_heads=1, force_tiled=False, tile_n=None,
                            approx_recip=True):
    """Channels-last (B, N, D) forward of AttentionBlock."""
    assert num_heads == 1, "kernel implements the module default num_heads=1"
    B, N, D = feature.shape
    residual = feature if opposite_feature is None else opposite_feature

    w_big, b_big, w_tail, b1c, w2t, b2 = _prepare_weights(params, num_heads)
    budget = _vmem_budget_bytes()

    if not force_tiled and _fused_workset_bytes(B, N, D) <= budget // 2:
        return _fused_forward(feature, residual, w_big, b_big, w_tail, b1c,
                              w2t, b2, budget=budget, approx_recip=approx_recip)
    return _tiled_forward(feature, residual, w_big, b_big, w_tail, b1c,
                          w2t, b2, budget=budget, tile_n=tile_n,
                          approx_recip=approx_recip)


# --------------------------------------------------------------------------- #
# Params + pure-JAX reference (for validation)
# --------------------------------------------------------------------------- #
def init_attention_block_params(key, in_dims):
    D = in_dims
    shapes = {
        "wq": (D, D), "bq": (D,),
        "wk": (D, D), "bk": (D,),
        "wv": (D, D), "bv": (D,),
        "w_in": (3 * D, D), "b_in": (3 * D,),     # MHA in_proj
        "wout": (D, D), "bout": (D,),             # MHA out_proj
        "wm": (D, D), "bm": (D,),                 # multihead_message conv
        "w1": (2 * D, 2 * D), "b1": (2 * D,),     # final_message conv 1
        "w2": (D, 2 * D), "b2": (D,),             # final_message conv 2
    }
    keys = jax.random.split(key, len(shapes))
    return {name: 0.2 * jax.random.normal(k, shp, jnp.float32)
            for (name, shp), k in zip(shapes.items(), keys)}


def _instance_norm(x, eps=_EPS):
    mean = jnp.mean(x, axis=1, keepdims=True)
    var = jnp.mean((x - mean) ** 2, axis=1, keepdims=True)
    return (x - mean) * jax.lax.rsqrt(var + eps)


def reference_forward(params, feature, opposite_feature=None, num_heads=1):
    """Pure-JAX mirror of the PyTorch forward (channels-last layout)."""
    B, N, D = feature.shape
    scale = 1.0 / np.sqrt(D // num_heads)
    P = jax.lax.Precision.HIGHEST

    def pconv(x, w, b):  # Conv1d(k=1): w is (out, in)
        return jnp.einsum("bnd,od->bno", x, w, precision=P) + b

    Q = pconv(feature, params["wq"], params["bq"])
    K = pconv(feature, params["wk"], params["bk"])
    V = pconv(feature, params["wv"], params["bv"])

    wiq, wik, wiv = jnp.split(params["w_in"], 3, axis=0)
    biq, bik, biv = jnp.split(params["b_in"], 3)
    qp = pconv(Q, wiq, biq) * scale
    kp = pconv(K, wik, bik)
    vp = pconv(V, wiv, biv)

    scores = jnp.einsum("ind,jnd->ijn", qp, kp, precision=P)
    aw = jax.nn.softmax(scores, axis=1)
    attn = jnp.einsum("ijn,jnd->ind", aw, vp, precision=P)

    attn_o = pconv(attn, params["wout"], params["bout"])
    mm = pconv(attn_o, params["wm"], params["bm"])

    cat = jnp.concatenate([Q, mm], axis=-1)
    y1 = jnp.einsum("bnc,oc->bno", cat, params["w1"], precision=P) + params["b1"]
    y1 = jax.nn.relu(_instance_norm(y1))
    y2 = jnp.einsum("bnc,oc->bno", y1, params["w2"], precision=P) + params["b2"]
    y2 = jax.nn.relu(_instance_norm(y2))

    resid = feature if opposite_feature is None else opposite_feature
    return resid + y2


def _check(out, ref, name):
    out, ref = np.asarray(out), np.asarray(ref)
    np.testing.assert_allclose(out, ref, rtol=5e-2, atol=1.5e-1, err_msg=name)
    assert float(np.mean(np.abs(out - ref))) < 3e-2, name
    assert np.all(np.isfinite(out)), name


# --------------------------------------------------------------------------- #
if __name__ == "__main__":
    key = jax.random.PRNGKey(0)
    k_feat, k_opp, k_param = jax.random.split(key, 3)

    B, D = 2, 32                       # batch, in_dims (small synthetic shapes)
    params = init_attention_block_params(k_param, D)

    # 1) Small shape -> fully fused single-kernel path (everything in VMEM).
    N_small = 64
    feat_s = jax.random.normal(k_feat, (B, N_small, D), jnp.float32)
    fused_fn = jax.jit(attention_block_forward)
    out_s = jax.block_until_ready(fused_fn(params, feat_s))
    _check(out_s, reference_forward(params, feat_s), "fused")
    assert out_s.shape == (B, N_small, D)

    # 1b) opposite_feature residual path.
    opp = jax.random.normal(k_opp, (B, N_small, D), jnp.float32)
    out_o = jax.block_until_ready(fused_fn(params, feat_s, opp))
    _check(out_o, reference_forward(params, feat_s, opp), "fused+opposite")

    # 2) Larger point count -> tiled 3-stage pipelined fallback
    #    (forced here so both code paths are exercised; tile auto-sizes to
    #    N//2 = 1024 points -> 2 parallel grid steps).
    N_big = 2048
    feat_b = jax.random.normal(k_feat, (B, N_big, D), jnp.float32)
    tiled_fn = jax.jit(functools.partial(attention_block_forward,
                                         force_tiled=True))
    out_b = jax.block_until_ready(tiled_fn(params, feat_b))
    _check(out_b, reference_forward(params, feat_b), "tiled")
    assert out_b.shape == (B, N_big, D)

    print("KERNEL_OK")
</pallas_src>

<mosaic_0001>
module attributes {stable_mosaic.version = 11 : i64} {
  func.func @_fused_kernel(%arg0: memref<2x64x32xf32, #tpu.memory_space<vmem>>, %arg1: memref<2x64x32xf32, #tpu.memory_space<vmem>>, %arg2: memref<32x96xbf16, #tpu.memory_space<vmem>>, %arg3: memref<1x96xf32, #tpu.memory_space<vmem>>, %arg4: memref<64x64xbf16, #tpu.memory_space<vmem>>, %arg5: memref<1x64xf32, #tpu.memory_space<vmem>>, %arg6: memref<64x32xbf16, #tpu.memory_space<vmem>>, %arg7: memref<1x32xf32, #tpu.memory_space<vmem>>, %arg8: memref<2x64x32xf32, #tpu.memory_space<vmem>>) attributes {dimension_semantics = [], scalar_prefetch = 0 : i64, scratch_operands = 0 : i64, tpu.core_type = #tpu.core_type<tc>} {
    %c0 = arith.constant 0 : index
    %c0_0 = arith.constant 0 : index
    %c0_1 = arith.constant 0 : index
    %0 = vector.load %arg0[%c0, %c0_0, %c0_1] : memref<2x64x32xf32, #tpu.memory_space<vmem>>, vector<2x64x32xf32>
    %c0_2 = arith.constant 0 : index
    %c0_3 = arith.constant 0 : index
    %1 = vector.load %arg2[%c0_2, %c0_3] : memref<32x96xbf16, #tpu.memory_space<vmem>>, vector<32x96xbf16>
    %c0_4 = arith.constant 0 : index
    %c0_5 = arith.constant 0 : index
    %2 = vector.load %arg3[%c0_4, %c0_5] : memref<1x96xf32, #tpu.memory_space<vmem>>, vector<1x96xf32>
    %c0_6 = arith.constant 0 : index
    %c0_7 = arith.constant 0 : index
    %3 = vector.load %arg4[%c0_6, %c0_7] : memref<64x64xbf16, #tpu.memory_space<vmem>>, vector<64x64xbf16>
    %c0_8 = arith.constant 0 : index
    %c0_9 = arith.constant 0 : index
    %4 = vector.load %arg5[%c0_8, %c0_9] : memref<1x64xf32, #tpu.memory_space<vmem>>, vector<1x64xf32>
    %5 = vector.shape_cast %0 : vector<2x64x32xf32> to vector<128x32xf32>
    %6 = arith.truncf %5 : vector<128x32xf32> to vector<128x32xbf16>
    %cst = arith.constant dense<0.000000e+00> : vector<128x96xf32>
    %7 = tpu.matmul %6, %1, %cst {dimension_numbers = #tpu.dot_dimension_numbers<[1], [0], [0], [1], [0, 0, 1, 1], [], []>} : vector<128x32xbf16>, vector<32x96xbf16>, vector<128x96xf32> -> vector<128x96xf32>
    %8 = vector.broadcast %2 : vector<1x96xf32> to vector<128x96xf32>
    %9 = arith.addf %7, %8 : vector<128x96xf32>
    %10 = vector.extract_strided_slice %9 {offsets = [0, 0], sizes = [128, 32], strides = [1, 1]} : vector<128x96xf32> to vector<128x32xf32>
    %11 = vector.shape_cast %10 : vector<128x32xf32> to vector<2x64x32xf32>
    %12 = vector.extract_strided_slice %9 {offsets = [0, 32], sizes = [128, 32], strides = [1, 1]} : vector<128x96xf32> to vector<128x32xf32>
    %13 = vector.shape_cast %12 : vector<128x32xf32> to vector<2x64x32xf32>
    %14 = vector.extract_strided_slice %9 {offsets = [0, 64], sizes = [128, 32], strides = [1, 1]} : vector<128x96xf32> to vector<128x32xf32>
    %15 = vector.shape_cast %14 : vector<128x32xf32> to vector<2x64x32xf32>
    %16 = vector.extract_strided_slice %13 {offsets = [0, 0, 0], sizes = [1, 64, 32], strides = [1, 1, 1]} : vector<2x64x32xf32> to vector<1x64x32xf32>
    %17 = vector.shape_cast %16 : vector<1x64x32xf32> to vector<64x32xf32>
    %18 = vector.shape_cast %17 : vector<64x32xf32> to vector<1x64x32xf32>
    %19 = vector.broadcast %18 : vector<1x64x32xf32> to vector<2x64x32xf32>
    %20 = arith.mulf %11, %19 : vector<2x64x32xf32>
    %cst_10 = arith.constant dense<0.000000e+00> : vector<2x64xf32>
    %21 = vector.multi_reduction <add>, %20, %cst_10 [2] : vector<2x64x32xf32> to vector<2x64xf32>
    %22 = vector.extract_strided_slice %13 {offsets = [1, 0, 0], sizes = [1, 64, 32], strides = [1, 1, 1]} : vector<2x64x32xf32> to vector<1x64x32xf32>
    %23 = vector.shape_cast %22 : vector<1x64x32xf32> to vector<64x32xf32>
    %24 = vector.shape_cast %23 : vector<64x32xf32> to vector<1x64x32xf32>
    %25 = vector.broadcast %24 : vector<1x64x32xf32> to vector<2x64x32xf32>
    %26 = arith.mulf %11, %25 : vector<2x64x32xf32>
    %cst_11 = arith.constant dense<0.000000e+00> : vector<2x64xf32>
    %27 = vector.multi_reduction <add>, %26, %cst_11 [2] : vector<2x64x32xf32> to vector<2x64xf32>
    %28 = vector.shape_cast %21 : vector<2x64xf32> to vector<2x1x64xf32>
    %29 = vector.shape_cast %27 : vector<2x64xf32> to vector<2x1x64xf32>
    %30 = tpu.concatenate %28, %29 in 1 : vector<2x1x64xf32>, vector<2x1x64xf32> -> vector<2x2x64xf32>
    %cst_12 = arith.constant dense<0xFF800000> : vector<2x64xf32>
    %31 = vector.multi_reduction <maximumf>, %30, %cst_12 [1] : vector<2x2x64xf32> to vector<2x64xf32>
    %32 = vector.shape_cast %31 : vector<2x64xf32> to vector<2x1x64xf32>
    %33 = vector.broadcast %32 : vector<2x1x64xf32> to vector<2x2x64xf32>
    %34 = arith.subf %30, %33 : vector<2x2x64xf32>
    %35 = math.exp %34 : vector<2x2x64xf32>
    %cst_13 = arith.constant dense<0.000000e+00> : vector<2x64xf32>
    %36 = vector.multi_reduction <add>, %35, %cst_13 [1] : vector<2x2x64xf32> to vector<2x64xf32>
    %37 = vector.shape_cast %36 : vector<2x64xf32> to vector<2x1x64xf32>
    %38 = tpu.reciprocal %37 {approx = true} : vector<2x1x64xf32> -> vector<2x1x64xf32>
    %39 = vector.broadcast %38 : vector<2x1x64xf32> to vector<2x2x64xf32>
    %40 = arith.mulf %35, %39 : vector<2x2x64xf32>
    %41 = vector.extract_strided_slice %40 {offsets = [0, 0, 0], sizes = [2, 1, 64], strides = [1, 1, 1]} : vector<2x2x64xf32> to vector<2x1x64xf32>
    %42 = vector.shape_cast %41 : vector<2x1x64xf32> to vector<2x64xf32>
    %43 = vector.shape_cast %42 : vector<2x64xf32> to vector<2x64x1xf32>
    %44 = vector.extract_strided_slice %15 {offsets = [0, 0, 0], sizes = [1, 64, 32], strides = [1, 1, 1]} : vector<2x64x32xf32> to vector<1x64x32xf32>
    %45 = vector.shape_cast %44 : vector<1x64x32xf32> to vector<64x32xf32>
    %46 = vector.shape_cast %45 : vector<64x32xf32> to vector<1x64x32xf32>
    %47 = vector.broadcast %43 : vector<2x64x1xf32> to vector<2x64x32xf32>
    %48 = vector.broadcast %46 : vector<1x64x32xf32> to vector<2x64x32xf32>
    %49 = arith.mulf %47, %48 : vector<2x64x32xf32>
    %50 = vector.extract_strided_slice %40 {offsets = [0, 1, 0], sizes = [2, 1, 64], strides = [1, 1, 1]} : vector<2x2x64xf32> to vector<2x1x64xf32>
    %51 = vector.shape_cast %50 : vector<2x1x64xf32> to vector<2x64xf32>
    %52 = vector.shape_cast %51 : vector<2x64xf32> to vector<2x64x1xf32>
    %53 = vector.extract_strided_slice %15 {offsets = [1, 0, 0], sizes = [1, 64, 32], strides = [1, 1, 1]} : vector<2x64x32xf32> to vector<1x64x32xf32>
    %54 = vector.shape_cast %53 : vector<1x64x32xf32> to vector<64x32xf32>
    %55 = vector.shape_cast %54 : vector<64x32xf32> to vector<1x64x32xf32>
    %56 = vector.broadcast %52 : vector<2x64x1xf32> to vector<2x64x32xf32>
    %57 = vector.broadcast %55 : vector<1x64x32xf32> to vector<2x64x32xf32>
    %58 = arith.mulf %56, %57 : vector<2x64x32xf32>
    %59 = arith.addf %49, %58 : vector<2x64x32xf32>
    %60 = vector.shape_cast %59 : vector<2x64x32xf32> to vector<128x32xf32>
    %61 = arith.truncf %60 : vector<128x32xf32> to vector<128x32xbf16>
    %62 = tpu.concatenate %6, %61 in 1 : vector<128x32xbf16>, vector<128x32xbf16> -> vector<128x64xbf16>
    %cst_14 = arith.constant dense<0.000000e+00> : vector<128x64xf32>
    %63 = tpu.matmul %62, %3, %cst_14 {dimension_numbers = #tpu.dot_dimension_numbers<[1], [0], [0], [1], [0, 0, 1, 1], [], []>} : vector<128x64xbf16>, vector<64x64xbf16>, vector<128x64xf32> -> vector<128x64xf32>
    %64 = vector.broadcast %4 : vector<1x64xf32> to vector<128x64xf32>
    %65 = arith.addf %63, %64 : vector<128x64xf32>
    %66 = vector.shape_cast %65 : vector<128x64xf32> to vector<2x64x64xf32>
    %cst_15 = arith.constant dense<0.000000e+00> : vector<2x64xf32>
    %67 = vector.multi_reduction <add>, %66, %cst_15 [1] : vector<2x64x64xf32> to vector<2x64xf32>
    %68 = vector.shape_cast %67 : vector<2x64xf32> to vector<2x1x64xf32>
    %cst_16 = arith.constant 6.400000e+01 : f32
    %69 = vector.broadcast %cst_16 : f32 to vector<2x1x64xf32>
    %70 = arith.divf %68, %69 : vector<2x1x64xf32>
    %71 = vector.broadcast %70 : vector<2x1x64xf32> to vector<2x64x64xf32>
    %72 = arith.subf %66, %71 : vector<2x64x64xf32>
    %73 = arith.mulf %72, %72 : vector<2x64x64xf32>
    %cst_17 = arith.constant dense<0.000000e+00> : vector<2x64xf32>
    %74 = vector.multi_reduction <add>, %73, %cst_17 [1] : vector<2x64x64xf32> to vector<2x64xf32>
    %75 = vector.shape_cast %74 : vector<2x64xf32> to vector<2x1x64xf32>
    %cst_18 = arith.constant 6.400000e+01 : f32
    %76 = vector.broadcast %cst_18 : f32 to vector<2x1x64xf32>
    %77 = arith.divf %75, %76 : vector<2x1x64xf32>
    %cst_19 = arith.constant 9.99999974E-6 : f32
    %78 = vector.broadcast %cst_19 : f32 to vector<2x1x64xf32>
    %79 = arith.addf %77, %78 : vector<2x1x64xf32>
    %80 = math.rsqrt %79 : vector<2x1x64xf32>
    %81 = vector.broadcast %80 : vector<2x1x64xf32> to vector<2x64x64xf32>
    %82 = arith.mulf %72, %81 : vector<2x64x64xf32>
    %cst_20 = arith.constant 0.000000e+00 : f32
    %83 = vector.broadcast %cst_20 : f32 to vector<2x64x64xf32>
    %84 = arith.maximumf %82, %83 : vector<2x64x64xf32>
    %85 = vector.shape_cast %84 : vector<2x64x64xf32> to vector<128x64xf32>
    %86 = arith.truncf %85 : vector<128x64xf32> to vector<128x64xbf16>
    %c0_21 = arith.constant 0 : index
    %c0_22 = arith.constant 0 : index
    %87 = vector.load %arg6[%c0_21, %c0_22] : memref<64x32xbf16, #tpu.memory_space<vmem>>, vector<64x32xbf16>
    %cst_23 = arith.constant dense<0.000000e+00> : vector<128x32xf32>
    %88 = tpu.matmul %86, %87, %cst_23 {dimension_numbers = #tpu.dot_dimension_numbers<[1], [0], [0], [1], [0, 0, 1, 1], [], []>} : vector<128x64xbf16>, vector<64x32xbf16>, vector<128x32xf32> -> vector<128x32xf32>
    %c0_24 = arith.constant 0 : index
    %c0_25 = arith.constant 0 : index
    %89 = vector.load %arg7[%c0_24, %c0_25] : memref<1x32xf32, #tpu.memory_space<vmem>>, vector<1x32xf32>
    %90 = vector.broadcast %89 : vector<1x32xf32> to vector<128x32xf32>
    %91 = arith.addf %88, %90 : vector<128x32xf32>
    %92 = vector.shape_cast %91 : vector<128x32xf32> to vector<2x64x32xf32>
    %cst_26 = arith.constant dense<0.000000e+00> : vector<2x32xf32>
    %93 = vector.multi_reduction <add>, %92, %cst_26 [1] : vector<2x64x32xf32> to vector<2x32xf32>
    %94 = vector.shape_cast %93 : vector<2x32xf32> to vector<2x1x32xf32>
    %cst_27 = arith.constant 6.400000e+01 : f32
    %95 = vector.broadcast %cst_27 : f32 to vector<2x1x32xf32>
    %96 = arith.divf %94, %95 : vector<2x1x32xf32>
    %97 = vector.broadcast %96 : vector<2x1x32xf32> to vector<2x64x32xf32>
    %98 = arith.subf %92, %97 : vector<2x64x32xf32>
    %99 = arith.mulf %98, %98 : vector<2x64x32xf32>
    %cst_28 = arith.constant dense<0.000000e+00> : vector<2x32xf32>
    %100 = vector.multi_reduction <add>, %99, %cst_28 [1] : vector<2x64x32xf32> to vector<2x32xf32>
    %101 = vector.shape_cast %100 : vector<2x32xf32> to vector<2x1x32xf32>
    %cst_29 = arith.constant 6.400000e+01 : f32
    %102 = vector.broadcast %cst_29 : f32 to vector<2x1x32xf32>
    %103 = arith.divf %101, %102 : vector<2x1x32xf32>
    %cst_30 = arith.constant 9.99999974E-6 : f32
    %104 = vector.broadcast %cst_30 : f32 to vector<2x1x32xf32>
    %105 = arith.addf %103, %104 : vector<2x1x32xf32>
    %106 = math.rsqrt %105 : vector<2x1x32xf32>
    %107 = vector.broadcast %106 : vector<2x1x32xf32> to vector<2x64x32xf32>
    %108 = arith.mulf %98, %107 : vector<2x64x32xf32>
    %cst_31 = arith.constant 0.000000e+00 : f32
    %109 = vector.broadcast %cst_31 : f32 to vector<2x64x32xf32>
    %110 = arith.maximumf %108, %109 : vector<2x64x32xf32>
    %c0_32 = arith.constant 0 : index
    %c0_33 = arith.constant 0 : index
    %c0_34 = arith.constant 0 : index
    %111 = vector.load %arg1[%c0_32, %c0_33, %c0_34] : memref<2x64x32xf32, #tpu.memory_space<vmem>>, vector<2x64x32xf32>
    %112 = arith.addf %111, %110 : vector<2x64x32xf32>
    %c0_35 = arith.constant 0 : index
    %c0_36 = arith.constant 0 : index
    %c0_37 = arith.constant 0 : index
    %113 = vector.load %arg8[%c0_35, %c0_36, %c0_37] : memref<2x64x32xf32, #tpu.memory_space<vmem>>, vector<2x64x32xf32>
    tpu.vector_store %arg8[%c0_35, %c0_36, %c0_37], %112 {strides = array<i32>} : memref<2x64x32xf32, #tpu.memory_space<vmem>>, vector<2x64x32xf32>,
    return
  }
}

</mosaic_0001>

<llo_original>
// kernel: attention_block_forward.1
$region0: #{attention_block_forward.1}
  #allocation0 [shape = 'u32[]', space=smem, size = 0x4, offset = 0x4, fixed_abs, tag = 'smem constant byte address 0x4 - core index']
  #allocation1 [shape = 'u32[144,128]{1,0:T(1,128)}', space=vmem, size = 0x12000, scoped, tag = 'internal scratch']
  %s0 = inlined_call_operand.vmem [shape: f32[2,64,32], index: 0, kind: input, shape index: {}, may-alias: {0,1}]
  %s1 = inlined_call_operand.vmem [shape: f32[2,64,32], index: 1, kind: input, shape index: {}, may-alias: {0,1}]
  %s2 = inlined_call_operand.vmem [shape: bf16[32,96], index: 2, kind: input, shape index: {}]
  %s3 = inlined_call_operand.vmem [shape: f32[1,96], index: 3, kind: input, shape index: {}]
  %s4 = inlined_call_operand.vmem [shape: bf16[64,64], index: 4, kind: input, shape index: {}]
  %s5 = inlined_call_operand.vmem [shape: f32[1,64], index: 5, kind: input, shape index: {}]
  %s6 = inlined_call_operand.vmem [shape: bf16[64,32], index: 6, kind: input, shape index: {}]
  %s7 = inlined_call_operand.vmem [shape: f32[1,32], index: 7, kind: input, shape index: {}]
  %s8 = inlined_call_operand.vmem [shape: f32[2,64,32], index: 8, kind: output, shape index: {}]
  %s9 = sld [smem:[#allocation0]]
  $region42: #{attention_block_forward.1} parent=0
    _
  %s11 = ssub.s32 1, %s9
  %s12 = scalar_select 0, %s11, %s9
  // Predicated region
  $region2: #{attention_block_forward.1} parent=0 // pred_check
    _
  $region3: #{attention_block_forward.1} parent=0 // pred_check_branch
    %14 = sbr.rel (0) target = $region5
  $region4: #{attention_block_forward.1} parent=0 // pred_region
    _
  $region5: #{attention_block_forward.1} parent=0 // pred_fallthru
    _
  // Predicated region
  $region6: #{attention_block_forward.1} parent=0 // pred_check
    _
  $region7: #{attention_block_forward.1} parent=0 // pred_check_branch
    %16 = sbr.rel (0) target = $region9
  $region8: #{attention_block_forward.1} parent=0 // pred_region
    _
  $region9: #{attention_block_forward.1} parent=0 // pred_fallthru
    _
  // Predicated region
  $region10: #{attention_block_forward.1} parent=0 // pred_check
    _
  $region11: #{attention_block_forward.1} parent=0 // pred_check_branch
    %18 = sbr.rel (0) target = $region13
  $region12: #{attention_block_forward.1} parent=0 // pred_region
    _
  $region13: #{attention_block_forward.1} parent=0 // pred_fallthru
    _
  // Predicated region
  $region14: #{attention_block_forward.1} parent=0 // pred_check
    _
  $region15: #{attention_block_forward.1} parent=0 // pred_check_branch
    %20 = sbr.rel (0) target = $region17
  $region16: #{attention_block_forward.1} parent=0 // pred_region
    _
  $region17: #{attention_block_forward.1} parent=0 // pred_fallthru
    _
  // Predicated region
  $region18: #{attention_block_forward.1} parent=0 // pred_check
    _
  $region19: #{attention_block_forward.1} parent=0 // pred_check_branch
    %22 = sbr.rel (0) target = $region21
  $region20: #{attention_block_forward.1} parent=0 // pred_region
    _
  $region21: #{attention_block_forward.1} parent=0 // pred_fallthru
    _
  // Predicated region
  $region22: #{attention_block_forward.1} parent=0 // pred_check
    _
  $region23: #{attention_block_forward.1} parent=0 // pred_check_branch
    %24 = sbr.rel (0) target = $region25
  $region24: #{attention_block_forward.1} parent=0 // pred_region
    _
  $region25: #{attention_block_forward.1} parent=0 // pred_fallthru
    _
  // Predicated region
  $region26: #{attention_block_forward.1} parent=0 // pred_check
    _
  $region27: #{attention_block_forward.1} parent=0 // pred_check_branch
    %26 = sbr.rel (0) target = $region29
  $region28: #{attention_block_forward.1} parent=0 // pred_region
    _
  $region29: #{attention_block_forward.1} parent=0 // pred_fallthru
    _
  // Predicated region
  $region30: #{attention_block_forward.1} parent=0 // pred_check
    _
  $region31: #{attention_block_forward.1} parent=0 // pred_check_branch
    %28 = sbr.rel (0) target = $region33
  $region32: #{attention_block_forward.1} parent=0 // pred_region
    _
  $region33: #{attention_block_forward.1} parent=0 // pred_fallthru
    _
  %v30 = vld [vmem:[%s0] sm:$0xff]
  %v31 = vld [vmem:[%s0 + $0x8] sm:$0xff]
  %v32 = vld [vmem:[%s0 + $0x10] sm:$0xff]
  %v33 = vld [vmem:[%s0 + $0x18] sm:$0xff]
  %v34 = vld [vmem:[%s0 + $0x20] sm:$0xff]
  %v35 = vld [vmem:[%s0 + $0x28] sm:$0xff]
  %v36 = vld [vmem:[%s0 + $0x30] sm:$0xff]
  %v37 = vld [vmem:[%s0 + $0x38] sm:$0xff]
  %v38 = vld [vmem:[%s0 + $0x40] sm:$0xff]
  %v39 = vld [vmem:[%s0 + $0x48] sm:$0xff]
  %v40 = vld [vmem:[%s0 + $0x50] sm:$0xff]
  %v41 = vld [vmem:[%s0 + $0x58] sm:$0xff]
  %v42 = vld [vmem:[%s0 + $0x60] sm:$0xff]
  %v43 = vld [vmem:[%s0 + $0x68] sm:$0xff]
  %v44 = vld [vmem:[%s0 + $0x70] sm:$0xff]
  %v45 = vld [vmem:[%s0 + $0x78] sm:$0xff]
  %v46 = vld [vmem:[%s2] sm:$0xf]
  %v47 = vld [vmem:[%s2 + $0x4] sm:$0xf]
  %v48 = vld [vmem:[%s2 + $0x8] sm:$0xf]
  %v49 = vld [vmem:[%s2 + $0xc] sm:$0xf]
  %v50 = vld [vmem:[%s3] sm:$0x1]
  %v51 = vld [vmem:[%s4] sm:$0xf]
  %v52 = vld [vmem:[%s4 + $0x4] sm:$0xf]
  %v53 = vld [vmem:[%s4 + $0x8] sm:$0xf]
  %v54 = vld [vmem:[%s4 + $0xc] sm:$0xf]
  %v55 = vld [vmem:[%s4 + $0x10] sm:$0xf]
  %v56 = vld [vmem:[%s4 + $0x14] sm:$0xf]
  %v57 = vld [vmem:[%s4 + $0x18] sm:$0xf]
  %v58 = vld [vmem:[%s4 + $0x1c] sm:$0xf]
  %v59 = vld [vmem:[%s5] sm:$0x1]
  %v60 = vpack.c.bf16 %v31, %v30
  %v61 = vpack.c.bf16 %v33, %v32
  %v62 = vpack.c.bf16 %v35, %v34
  %v63 = vpack.c.bf16 %v37, %v36
  %v64 = vpack.c.bf16 %v39, %v38
  %v65 = vpack.c.bf16 %v41, %v40
  %v66 = vpack.c.bf16 %v43, %v42
  %v67 = vpack.c.bf16 %v45, %v44
  %v69 = vlaneseq
  %v70 = vshrl.u32 %v69, 7
  %v71 = vsub.s32 0, %v70
  %v72 = vrot.slane %v50, %v71
  %v78 = vunpack.c.l.b16 %v46
  %v79 = vunpack.c.l.b16 %v47
  %v80 = vunpack.c.l.b16 %v48
  %v81 = vunpack.c.l.b16 %v49
  %v82 = vpack.c.b16 %v79, %v78
  %v83 = vpack.c.b16 %v81, %v80
  %vm86 = vcmask 261120
  %v88 = vsel %vm86, %v60, 0
  %v91 = vsel %vm86, %v61, 0
  %v94 = vsel %vm86, %v62, 0
  %v97 = vsel %vm86, %v63, 0
  %v100 = vsel %vm86, %v64, 0
  %v103 = vsel %vm86, %v65, 0
  %v106 = vsel %vm86, %v66, 0
  %v109 = vsel %vm86, %v67, 0
  %111 = vmatprep.subr.bf16.mxu0 0
  %112 = vmatpush1.bf16.msra.mxu0 %v82
  %113 = vmatprep.subr.bf16.mxu0 0
  %114 = vmatpush1.bf16.msra.mxu0 %v83
  %115 = vmatprep.subr.bf16.mxu0 0
  %116 = vmatpush1.bf16.msra.mxu0 0
  %117 = vmatprep.subr.bf16.mxu0 0
  %118 = vmatpush1.bf16.msra.mxu0 0
  %119 = vmatprep.subr.bf16.mxu0 0
  %120 = vmatpush1.bf16.msra.mxu0 0
  %121 = vmatprep.subr.bf16.mxu0 0
  %122 = vmatpush1.bf16.msra.mxu0 0
  %123 = vmatprep.subr.bf16.mxu0 0
  %124 = vmatpush1.bf16.msra.mxu0 0
  %125 = vmatprep.subr.bf16.mxu0 0
  %126 = vmatpush1.bf16.msra.mxu0 0
  %127 = vmatprep.subr.bf16.mxu0 0
  %128 = vmatpush1.bf16.msra.mxu0 0
  %129 = vmatprep.subr.bf16.mxu0 0
  %130 = vmatpush1.bf16.msra.mxu0 0
  %131 = vmatprep.subr.bf16.mxu0 0
  %132 = vmatpush1.bf16.msra.mxu0 0
  %133 = vmatprep.subr.bf16.mxu0 0
  %134 = vmatpush1.bf16.msra.mxu0 0
  %135 = vmatprep.subr.bf16.mxu0 0
  %136 = vmatpush1.bf16.msra.mxu0 0
  %137 = vmatprep.subr.bf16.mxu0 0
  %138 = vmatpush1.bf16.msra.mxu0 0
  %139 = vmatprep.subr.bf16.mxu0 0
  %140 = vmatpush1.bf16.msra.mxu0 0
  %141 = vmatprep.subr.bf16.mxu0 0
  %142 = vmatpush1.bf16.msra.mxu0 0
  %143 = vmatprep.mubr.bf16.mxu0 0
  %144 = vmatmul.mubr.bf16.gmra.mrb[0].mxu0 %v88
  %v145 = vpop.f32.mrb[0].mxu0
  %v146 = vadd.f32 %v72, %v145
  %v147 = vpop.f32.mrb[0].mxu0
  %v148 = vpop.f32.mrb[0].mxu0
  %v149 = vadd.f32 %v72, %v148
  %v150 = vpop.f32.mrb[0].mxu0
  %151 = vmatprep.mubr.bf16.mxu0 0
  %152 = vmatmul.mubr.bf16.gmra.mrb[0].mxu0 %v91
  %v153 = vpop.f32.mrb[0].mxu0
  %v154 = vadd.f32 %v72, %v153
  %v155 = vpop.f32.mrb[0].mxu0
  %v156 = vpop.f32.mrb[0].mxu0
  %v157 = vadd.f32 %v72, %v156
  %v158 = vpop.f32.mrb[0].mxu0
  %159 = vmatprep.mubr.bf16.mxu0 0
  %160 = vmatmul.mubr.bf16.gmra.mrb[0].mxu0 %v94
  %v161 = vpop.f32.mrb[0].mxu0
  %v162 = vadd.f32 %v72, %v161
  %v163 = vpop.f32.mrb[0].mxu0
  %v164 = vpop.f32.mrb[0].mxu0
  %v165 = vadd.f32 %v72, %v164
  %v166 = vpop.f32.mrb[0].mxu0
  %167 = vmatprep.mubr.bf16.mxu0 0
  %168 = vmatmul.mubr.bf16.gmra.mrb[0].mxu0 %v97
  %v169 = vpop.f32.mrb[0].mxu0
  %v170 = vadd.f32 %v72, %v169
  %v171 = vpop.f32.mrb[0].mxu0
  %v172 = vpop.f32.mrb[0].mxu0
  %v173 = vadd.f32 %v72, %v172
  %v174 = vpop.f32.mrb[0].mxu0
  %175 = vmatprep.mubr.bf16.mxu0 0
  %176 = vmatmul.mubr.bf16.gmra.mrb[0].mxu0 %v100
  %v177 = vpop.f32.mrb[0].mxu0
  %v178 = vadd.f32 %v72, %v177
  %v179 = vpop.f32.mrb[0].mxu0
  %v180 = vpop.f32.mrb[0].mxu0
  %v181 = vadd.f32 %v72, %v180
  %v182 = vpop.f32.mrb[0].mxu0
  %183 = vmatprep.mubr.bf16.mxu0 0
  %184 = vmatmul.mubr.bf16.gmra.mrb[0].mxu0 %v103
  %v185 = vpop.f32.mrb[0].mxu0
  %v186 = vadd.f32 %v72, %v185
  %v187 = vpop.f32.mrb[0].mxu0
  %v188 = vpop.f32.mrb[0].mxu0
  %v189 = vadd.f32 %v72, %v188
  %v190 = vpop.f32.mrb[0].mxu0
  %191 = vmatprep.mubr.bf16.mxu0 0
  %192 = vmatmul.mubr.bf16.gmra.mrb[0].mxu0 %v106
  %v193 = vpop.f32.mrb[0].mxu0
  %v194 = vadd.f32 %v72, %v193
  %v195 = vpop.f32.mrb[0].mxu0
  %v196 = vpop.f32.mrb[0].mxu0
  %v197 = vadd.f32 %v72, %v196
  %v198 = vpop.f32.mrb[0].mxu0
  %199 = vmatprep.mubr.bf16.mxu0 0
  %200 = vmatmul.mubr.bf16.gmra.mrb[0].mxu0 %v109
  %v201 = vpop.f32.mrb[0].mxu0
  %v202 = vadd.f32 %v72, %v201
  %v203 = vpop.f32.mrb[0].mxu0
  %v204 = vpop.f32.mrb[0].mxu0
  %v205 = vadd.f32 %v72, %v204
  %v206 = vpop.f32.mrb[0].mxu0
  %207 = vdwg.mxu0
  %216 = vrot.lane.b32.xlu0 %v146, 96
  %v217 = vpop.permute.xlu0 %216
  %218 = vrot.lane.b32.xlu0 %v149, 96
  %v219 = vpop.permute.xlu0 %218
  %220 = vrot.lane.b32.xlu0 %v154, 96
  %v221 = vpop.permute.xlu0 %220
  %222 = vrot.lane.b32.xlu0 %v157, 96
  %v223 = vpop.permute.xlu0 %222
  %224 = vrot.lane.b32.xlu0 %v162, 96
  %v225 = vpop.permute.xlu0 %224
  %226 = vrot.lane.b32.xlu0 %v165, 96
  %v227 = vpop.permute.xlu0 %226
  %228 = vrot.lane.b32.xlu0 %v170, 96
  %v229 = vpop.permute.xlu0 %228
  %230 = vrot.lane.b32.xlu0 %v173, 96
  %v231 = vpop.permute.xlu0 %230
  %v240 = vmul.f32 %v146, %v217
  %v241 = vmul.f32 %v149, %v219
  %v242 = vmul.f32 %v154, %v221
  %v243 = vmul.f32 %v157, %v223
  %v244 = vmul.f32 %v162, %v225
  %v245 = vmul.f32 %v165, %v227
  %v246 = vmul.f32 %v170, %v229
  %v247 = vmul.f32 %v173, %v231
  %v248 = vmul.f32 %v178, %v217
  %v249 = vmul.f32 %v181, %v219
  %v250 = vmul.f32 %v186, %v221
  %v251 = vmul.f32 %v189, %v223
  %v252 = vmul.f32 %v194, %v225
  %v253 = vmul.f32 %v197, %v227
  %v254 = vmul.f32 %v202, %v229
  %v255 = vmul.f32 %v205, %v231
  %v256 = vsel %vm86, %v240, 0.0
  %257 = vadd.xlane.f32.xlu0 %v256
  %v258 = vpop.xlane.xlu0 %257
  %v259 = vsel %vm86, %v241, 0.0
  %260 = vadd.xlane.f32.xlu0 %v259
  %v261 = vpop.xlane.xlu0 %260
  %v262 = vsel %vm86, %v242, 0.0
  %263 = vadd.xlane.f32.xlu0 %v262
  %v264 = vpop.xlane.xlu0 %263
  %v265 = vsel %vm86, %v243, 0.0
  %266 = vadd.xlane.f32.xlu0 %v265
  %v267 = vpop.xlane.xlu0 %266
  %v268 = vsel %vm86, %v244, 0.0
  %269 = vadd.xlane.f32.xlu0 %v268
  %v270 = vpop.xlane.xlu0 %269
  %v271 = vsel %vm86, %v245, 0.0
  %272 = vadd.xlane.f32.xlu0 %v271
  %v273 = vpop.xlane.xlu0 %272
  %v274 = vsel %vm86, %v246, 0.0
  %275 = vadd.xlane.f32.xlu0 %v274
  %v276 = vpop.xlane.xlu0 %275
  %v277 = vsel %vm86, %v247, 0.0
  %278 = vadd.xlane.f32.xlu0 %v277
  %v279 = vpop.xlane.xlu0 %278
  %v280 = vsel %vm86, %v248, 0.0
  %281 = vadd.xlane.f32.xlu0 %v280
  %v282 = vpop.xlane.xlu0 %281
  %v283 = vsel %vm86, %v249, 0.0
  %284 = vadd.xlane.f32.xlu0 %v283
  %v285 = vpop.xlane.xlu0 %284
  %v286 = vsel %vm86, %v250, 0.0
  %287 = vadd.xlane.f32.xlu0 %v286
  %v288 = vpop.xlane.xlu0 %287
  %v289 = vsel %vm86, %v251, 0.0
  %290 = vadd.xlane.f32.xlu0 %v289
  %v291 = vpop.xlane.xlu0 %290
  %v292 = vsel %vm86, %v252, 0.0
  %293 = vadd.xlane.f32.xlu0 %v292
  %v294 = vpop.xlane.xlu0 %293
  %v295 = vsel %vm86, %v253, 0.0
  %296 = vadd.xlane.f32.xlu0 %v295
  %v297 = vpop.xlane.xlu0 %296
  %v298 = vsel %vm86, %v254, 0.0
  %299 = vadd.xlane.f32.xlu0 %v298
  %v300 = vpop.xlane.xlu0 %299
  %v301 = vsel %vm86, %v255, 0.0
  %302 = vadd.xlane.f32.xlu0 %v301
  %v303 = vpop.xlane.xlu0 %302
  %312 = vrot.lane.b32.xlu0 %v178, 96
  %v313 = vpop.permute.xlu0 %312
  %314 = vrot.lane.b32.xlu0 %v181, 96
  %v315 = vpop.permute.xlu0 %314
  %316 = vrot.lane.b32.xlu0 %v186, 96
  %v317 = vpop.permute.xlu0 %316
  %318 = vrot.lane.b32.xlu0 %v189, 96
  %v319 = vpop.permute.xlu0 %318
  %320 = vrot.lane.b32.xlu0 %v194, 96
  %v321 = vpop.permute.xlu0 %320
  %322 = vrot.lane.b32.xlu0 %v197, 96
  %v323 = vpop.permute.xlu0 %322
  %324 = vrot.lane.b32.xlu0 %v202, 96
  %v325 = vpop.permute.xlu0 %324
  %326 = vrot.lane.b32.xlu0 %v205, 96
  %v327 = vpop.permute.xlu0 %326
  %v336 = vmul.f32 %v146, %v313
  %v337 = vmul.f32 %v149, %v315
  %v338 = vmul.f32 %v154, %v317
  %v339 = vmul.f32 %v157, %v319
  %v340 = vmul.f32 %v162, %v321
  %v341 = vmul.f32 %v165, %v323
  %v342 = vmul.f32 %v170, %v325
  %v343 = vmul.f32 %v173, %v327
  %v344 = vmul.f32 %v178, %v313
  %v345 = vmul.f32 %v181, %v315
  %v346 = vmul.f32 %v186, %v317
  %v347 = vmul.f32 %v189, %v319
  %v348 = vmul.f32 %v194, %v321
  %v349 = vmul.f32 %v197, %v323
  %v350 = vmul.f32 %v202, %v325
  %v351 = vmul.f32 %v205, %v327
  %v352 = vsel %vm86, %v336, 0.0
  %353 = vadd.xlane.f32.xlu0 %v352
  %v354 = vpop.xlane.xlu0 %353
  %v355 = vsel %vm86, %v337, 0.0
  %356 = vadd.xlane.f32.xlu0 %v355
  %v357 = vpop.xlane.xlu0 %356
  %v358 = vsel %vm86, %v338, 0.0
  %359 = vadd.xlane.f32.xlu0 %v358
  %v360 = vpop.xlane.xlu0 %359
  %v361 = vsel %vm86, %v339, 0.0
  %362 = vadd.xlane.f32.xlu0 %v361
  %v363 = vpop.xlane.xlu0 %362
  %v364 = vsel %vm86, %v340, 0.0
  %365 = vadd.xlane.f32.xlu0 %v364
  %v366 = vpop.xlane.xlu0 %365
  %v367 = vsel %vm86, %v341, 0.0
  %368 = vadd.xlane.f32.xlu0 %v367
  %v369 = vpop.xlane.xlu0 %368
  %v370 = vsel %vm86, %v342, 0.0
  %371 = vadd.xlane.f32.xlu0 %v370
  %v372 = vpop.xlane.xlu0 %371
  %v373 = vsel %vm86, %v343, 0.0
  %374 = vadd.xlane.f32.xlu0 %v373
  %v375 = vpop.xlane.xlu0 %374
  %v376 = vsel %vm86, %v344, 0.0
  %377 = vadd.xlane.f32.xlu0 %v376
  %v378 = vpop.xlane.xlu0 %377
  %v379 = vsel %vm86, %v345, 0.0
  %380 = vadd.xlane.f32.xlu0 %v379
  %v381 = vpop.xlane.xlu0 %380
  %v382 = vsel %vm86, %v346, 0.0
  %383 = vadd.xlane.f32.xlu0 %v382
  %v384 = vpop.xlane.xlu0 %383
  %v385 = vsel %vm86, %v347, 0.0
  %386 = vadd.xlane.f32.xlu0 %v385
  %v387 = vpop.xlane.xlu0 %386
  %v388 = vsel %vm86, %v348, 0.0
  %389 = vadd.xlane.f32.xlu0 %v388
  %v390 = vpop.xlane.xlu0 %389
  %v391 = vsel %vm86, %v349, 0.0
  %392 = vadd.xlane.f32.xlu0 %v391
  %v393 = vpop.xlane.xlu0 %392
  %v394 = vsel %vm86, %v350, 0.0
  %395 = vadd.xlane.f32.xlu0 %v394
  %v396 = vpop.xlane.xlu0 %395
  %v397 = vsel %vm86, %v351, 0.0
  %398 = vadd.xlane.f32.xlu0 %v397
  %v399 = vpop.xlane.xlu0 %398
  %v416 = vlaneseq
  %v417 = vand.u32 %v416, 127
  %v418 = vlaneseq
  %v419 = vshrl.u32 %v418, 7
  %v420 = vsub.s32 %v417, %v419
  %v421 = vrot.slane %v258, %v420
  %v422 = vadd.s32 %v417, 4294967288
  %v423 = vlaneseq
  %v424 = vshrl.u32 %v423, 7
  %v425 = vsub.s32 %v422, %v424
  %v426 = vrot.slane %v261, %v425
  %vm427 = vcmask 130112
  %v428 = vsel %vm427, %v426, %v421
  %v429 = vadd.s32 %v417, 4294967280
  %v430 = vlaneseq
  %v431 = vshrl.u32 %v430, 7
  %v432 = vsub.s32 %v429, %v431
  %v433 = vrot.slane %v264, %v432
  %vm434 = vcmask 195712
  %v435 = vsel %vm434, %v433, %v428
  %v436 = vadd.s32 %v417, 4294967272
  %v437 = vlaneseq
  %v438 = vshrl.u32 %v437, 7
  %v439 = vsub.s32 %v436, %v438
  %v440 = vrot.slane %v267, %v439
  %vm441 = vcmask 261312
  %v442 = vsel %vm441, %v440, %v435
  %v443 = vadd.s32 %v417, 4294967264
  %v444 = vlaneseq
  %v445 = vshrl.u32 %v444, 7
  %v446 = vsub.s32 %v443, %v445
  %v447 = vrot.slane %v270, %v446
  %vm448 = vcmask 326912
  %v449 = vsel %vm448, %v447, %v442
  %v450 = vadd.s32 %v417, 4294967256
  %v451 = vlaneseq
  %v452 = vshrl.u32 %v451, 7
  %v453 = vsub.s32 %v450, %v452
  %v454 = vrot.slane %v273, %v453
  %vm455 = vcmask 392512
  %v456 = vsel %vm455, %v454, %v449
  %v457 = vadd.s32 %v417, 4294967248
  %v458 = vlaneseq
  %v459 = vshrl.u32 %v458, 7
  %v460 = vsub.s32 %v457, %v459
  %v461 = vrot.slane %v276, %v460
  %vm462 = vcmask 458112
  %v463 = vsel %vm462, %v461, %v456
  %v464 = vadd.s32 %v417, 4294967240
  %v465 = vlaneseq
  %v466 = vshrl.u32 %v465, 7
  %v467 = vsub.s32 %v464, %v466
  %v468 = vrot.slane %v279, %v467
  %vm469 = vcmask 523712
  %v470 = vsel %vm469, %v468, %v463
  %v471 = vlaneseq
  %v472 = vshrl.u32 %v471, 7
  %v473 = vsub.s32 %v417, %v472
  %v474 = vrot.slane %v282, %v473
  %v475 = vlaneseq
  %v476 = vshrl.u32 %v475, 7
  %v477 = vsub.s32 %v422, %v476
  %v478 = vrot.slane %v285, %v477
  %v479 = vsel %vm427, %v478, %v474
  %v480 = vlaneseq
  %v481 = vshrl.u32 %v480, 7
  %v482 = vsub.s32 %v429, %v481
  %v483 = vrot.slane %v288, %v482
  %v484 = vsel %vm434, %v483, %v479
  %v485 = vlaneseq
  %v486 = vshrl.u32 %v485, 7
  %v487 = vsub.s32 %v436, %v486
  %v488 = vrot.slane %v291, %v487
  %v489 = vsel %vm441, %v488, %v484
  %v490 = vlaneseq
  %v491 = vshrl.u32 %v490, 7
  %v492 = vsub.s32 %v443, %v491
  %v493 = vrot.slane %v294, %v492
  %v494 = vsel %vm448, %v493, %v489
  %v495 = vlaneseq
  %v496 = vshrl.u32 %v495, 7
  %v497 = vsub.s32 %v450, %v496
  %v498 = vrot.slane %v297, %v497
  %v499 = vsel %vm455, %v498, %v494
  %v500 = vlaneseq
  %v501 = vshrl.u32 %v500, 7
  %v502 = vsub.s32 %v457, %v501
  %v503 = vrot.slane %v300, %v502
  %v504 = vsel %vm462, %v503, %v499
  %v505 = vlaneseq
  %v506 = vshrl.u32 %v505, 7
  %v507 = vsub.s32 %v464, %v506
  %v508 = vrot.slane %v303, %v507
  %v509 = vsel %vm469, %v508, %v504
  %v528 = vlaneseq
  %v529 = vshrl.u32 %v528, 7
  %v530 = vsub.s32 %v417, %v529
  %v531 = vrot.slane %v354, %v530
  %v532 = vlaneseq
  %v533 = vshrl.u32 %v532, 7
  %v534 = vsub.s32 %v422, %v533
  %v535 = vrot.slane %v357, %v534
  %v536 = vsel %vm427, %v535, %v531
  %v537 = vlaneseq
  %v538 = vshrl.u32 %v537, 7
  %v539 = vsub.s32 %v429, %v538
  %v540 = vrot.slane %v360, %v539
  %v541 = vsel %vm434, %v540, %v536
  %v542 = vlaneseq
  %v543 = vshrl.u32 %v542, 7
  %v544 = vsub.s32 %v436, %v543
  %v545 = vrot.slane %v363, %v544
  %v546 = vsel %vm441, %v545, %v541
  %v547 = vlaneseq
  %v548 = vshrl.u32 %v547, 7
  %v549 = vsub.s32 %v443, %v548
  %v550 = vrot.slane %v366, %v549
  %v551 = vsel %vm448, %v550, %v546
  %v552 = vlaneseq
  %v553 = vshrl.u32 %v552, 7
  %v554 = vsub.s32 %v450, %v553
  %v555 = vrot.slane %v369, %v554
  %v556 = vsel %vm455, %v555, %v551
  %v557 = vlaneseq
  %v558 = vshrl.u32 %v557, 7
  %v559 = vsub.s32 %v457, %v558
  %v560 = vrot.slane %v372, %v559
  %v561 = vsel %vm462, %v560, %v556
  %v562 = vlaneseq
  %v563 = vshrl.u32 %v562, 7
  %v564 = vsub.s32 %v464, %v563
  %v565 = vrot.slane %v375, %v564
  %v566 = vsel %vm469, %v565, %v561
  %v567 = vlaneseq
  %v568 = vshrl.u32 %v567, 7
  %v569 = vsub.s32 %v417, %v568
  %v570 = vrot.slane %v378, %v569
  %v571 = vlaneseq
  %v572 = vshrl.u32 %v571, 7
  %v573 = vsub.s32 %v422, %v572
  %v574 = vrot.slane %v381, %v573
  %v575 = vsel %vm427, %v574, %v570
  %v576 = vlaneseq
  %v577 = vshrl.u32 %v576, 7
  %v578 = vsub.s32 %v429, %v577
  %v579 = vrot.slane %v384, %v578
  %v580 = vsel %vm434, %v579, %v575
  %v581 = vlaneseq
  %v582 = vshrl.u32 %v581, 7
  %v583 = vsub.s32 %v436, %v582
  %v584 = vrot.slane %v387, %v583
  %v585 = vsel %vm441, %v584, %v580
  %v586 = vlaneseq
  %v587 = vshrl.u32 %v586, 7
  %v588 = vsub.s32 %v443, %v587
  %v589 = vrot.slane %v390, %v588
  %v590 = vsel %vm448, %v589, %v585
  %v591 = vlaneseq
  %v592 = vshrl.u32 %v591, 7
  %v593 = vsub.s32 %v450, %v592
  %v594 = vrot.slane %v393, %v593
  %v595 = vsel %vm455, %v594, %v590
  %v596 = vlaneseq
  %v597 = vshrl.u32 %v596, 7
  %v598 = vsub.s32 %v457, %v597
  %v599 = vrot.slane %v396, %v598
  %v600 = vsel %vm462, %v599, %v595
  %v601 = vlaneseq
  %v602 = vshrl.u32 %v601, 7
  %v603 = vsub.s32 %v464, %v602
  %v604 = vrot.slane %v399, %v603
  %v605 = vsel %vm469, %v604, %v600
  %vm608 = vcmask 1040384
  %v609 = vsel %vm608, %v470, %v566
  %v610 = vsel %vm608, %v509, %v605
  %vm611 = vcmask 517120
  %v612 = vsel %vm611, %v609, -inf
  %v613 = vrot.slane %v612, 4
  %v614 = vmax.f32 %v612, %v613
  %v615 = vrot.slane %v614, 2
  %v616 = vmax.f32 %v614, %v615
  %v617 = vrot.slane %v616, 1
  %v618 = vmax.f32 %v616, %v617
  %v619 = vsel %vm611, %v610, -inf
  %v620 = vrot.slane %v619, 4
  %v621 = vmax.f32 %v619, %v620
  %v622 = vrot.slane %v621, 2
  %v623 = vmax.f32 %v621, %v622
  %v624 = vrot.slane %v623, 1
  %v625 = vmax.f32 %v623, %v624
  %v626 = vsub.f32 %v609, %v618
  %v627 = vsub.f32 %v610, %v625
  %v628 = vmul.f32 %v626, 1.442695
  %v629 = vpow.pop %v628
  %v630 = vmul.f32 %v627, 1.442695
  %v631 = vpow.pop %v630
  %v632 = vsel %vm611, %v629, 0.0
  %v633 = vrot.slane %v632, 4
  %v634 = vadd.f32 %v632, %v633
  %v635 = vrot.slane %v634, 2
  %v636 = vadd.f32 %v634, %v635
  %v637 = vrot.slane %v636, 1
  %v638 = vadd.f32 %v636, %v637
  %v639 = vsel %vm611, %v631, 0.0
  %v640 = vrot.slane %v639, 4
  %v641 = vadd.f32 %v639, %v640
  %v642 = vrot.slane %v641, 2
  %v643 = vadd.f32 %v641, %v642
  %v644 = vrot.slane %v643, 1
  %v645 = vadd.f32 %v643, %v644
  %v646 = vrcp.pop %v638
  %v647 = vrcp.pop %v645
  %v648 = vmul.f32 %v629, %v646
  %v649 = vmul.f32 %v631, %v647
  %v650 = vlaneseq
  %v651 = vshrl.u32 %v650, 7
  %v652 = vsub.s32 0, %v651
  %v653 = vrot.slane %v648, %v652
  %655 = vbcast.lane.b32.xlu0 %v653, 256
  %v656 = vpop.permute.xlu0 %655
  %s658 = sor.u32 256, 8
  %659 = vbcast.lane.b32.xlu0 %v653, %s658
  %v660 = vpop.permute.xlu0 %659
  %s662 = sor.u32 256, 16
  %663 = vbcast.lane.b32.xlu0 %v653, %s662
  %v664 = vpop.permute.xlu0 %663
  %s666 = sor.u32 256, 24
  %667 = vbcast.lane.b32.xlu0 %v653, %s666
  %v668 = vpop.permute.xlu0 %667
  %s670 = sor.u32 256, 32
  %671 = vbcast.lane.b32.xlu0 %v653, %s670
  %v672 = vpop.permute.xlu0 %671
  %s674 = sor.u32 256, 40
  %675 = vbcast.lane.b32.xlu0 %v653, %s674
  %v676 = vpop.permute.xlu0 %675
  %s678 = sor.u32 256, 48
  %679 = vbcast.lane.b32.xlu0 %v653, %s678
  %v680 = vpop.permute.xlu0 %679
  %s682 = sor.u32 256, 56
  %683 = vbcast.lane.b32.xlu0 %v653, %s682
  %v684 = vpop.permute.xlu0 %683
  %v685 = vlaneseq
  %v686 = vshrl.u32 %v685, 7
  %v687 = vsub.s32 0, %v686
  %v688 = vrot.slane %v649, %v687
  %690 = vbcast.lane.b32.xlu0 %v688, 256
  %v691 = vpop.permute.xlu0 %690
  %s693 = sor.u32 256, 8
  %694 = vbcast.lane.b32.xlu0 %v688, %s693
  %v695 = vpop.permute.xlu0 %694
  %s697 = sor.u32 256, 16
  %698 = vbcast.lane.b32.xlu0 %v688, %s697
  %v699 = vpop.permute.xlu0 %698
  %s701 = sor.u32 256, 24
  %702 = vbcast.lane.b32.xlu0 %v688, %s701
  %v703 = vpop.permute.xlu0 %702
  %s705 = sor.u32 256, 32
  %706 = vbcast.lane.b32.xlu0 %v688, %s705
  %v707 = vpop.permute.xlu0 %706
  %s709 = sor.u32 256, 40
  %710 = vbcast.lane.b32.xlu0 %v688, %s709
  %v711 = vpop.permute.xlu0 %710
  %s713 = sor.u32 256, 48
  %714 = vbcast.lane.b32.xlu0 %v688, %s713
  %v715 = vpop.permute.xlu0 %714
  %s717 = sor.u32 256, 56
  %718 = vbcast.lane.b32.xlu0 %v688, %s717
  %v719 = vpop.permute.xlu0 %718
  %v720 = vmul.f32 %v656, %v146
  %v721 = vmul.f32 %v660, %v149
  %v722 = vmul.f32 %v664, %v154
  %v723 = vmul.f32 %v668, %v157
  %v724 = vmul.f32 %v672, %v162
  %v725 = vmul.f32 %v676, %v165
  %v726 = vmul.f32 %v680, %v170
  %v727 = vmul.f32 %v684, %v173
  %v728 = vmul.f32 %v691, %v146
  %v729 = vmul.f32 %v695, %v149
  %v730 = vmul.f32 %v699, %v154
  %v731 = vmul.f32 %v703, %v157
  %v732 = vmul.f32 %v707, %v162
  %v733 = vmul.f32 %v711, %v165
  %v734 = vmul.f32 %v715, %v170
  %v735 = vmul.f32 %v719, %v173
  %v736 = vlaneseq
  %v737 = vshrl.u32 %v736, 7
  %v738 = vsub.s32 1, %v737
  %v739 = vrot.slane %v648, %v738
  %741 = vbcast.lane.b32.xlu0 %v739, 256
  %v742 = vpop.permute.xlu0 %741
  %s744 = sor.u32 256, 8
  %745 = vbcast.lane.b32.xlu0 %v739, %s744
  %v746 = vpop.permute.xlu0 %745
  %s748 = sor.u32 256, 16
  %749 = vbcast.lane.b32.xlu0 %v739, %s748
  %v750 = vpop.permute.xlu0 %749
  %s752 = sor.u32 256, 24
  %753 = vbcast.lane.b32.xlu0 %v739, %s752
  %v754 = vpop.permute.xlu0 %753
  %s756 = sor.u32 256, 32
  %757 = vbcast.lane.b32.xlu0 %v739, %s756
  %v758 = vpop.permute.xlu0 %757
  %s760 = sor.u32 256, 40
  %761 = vbcast.lane.b32.xlu0 %v739, %s760
  %v762 = vpop.permute.xlu0 %761
  %s764 = sor.u32 256, 48
  %765 = vbcast.lane.b32.xlu0 %v739, %s764
  %v766 = vpop.permute.xlu0 %765
  %s768 = sor.u32 256, 56
  %769 = vbcast.lane.b32.xlu0 %v739, %s768
  %v770 = vpop.permute.xlu0 %769
  %v771 = vlaneseq
  %v772 = vshrl.u32 %v771, 7
  %v773 = vsub.s32 1, %v772
  %v774 = vrot.slane %v649, %v773
  %776 = vbcast.lane.b32.xlu0 %v774, 256
  %v777 = vpop.permute.xlu0 %776
  %s779 = sor.u32 256, 8
  %780 = vbcast.lane.b32.xlu0 %v774, %s779
  %v781 = vpop.permute.xlu0 %780
  %s783 = sor.u32 256, 16
  %784 = vbcast.lane.b32.xlu0 %v774, %s783
  %v785 = vpop.permute.xlu0 %784
  %s787 = sor.u32 256, 24
  %788 = vbcast.lane.b32.xlu0 %v774, %s787
  %v789 = vpop.permute.xlu0 %788
  %s791 = sor.u32 256, 32
  %792 = vbcast.lane.b32.xlu0 %v774, %s791
  %v793 = vpop.permute.xlu0 %792
  %s795 = sor.u32 256, 40
  %796 = vbcast.lane.b32.xlu0 %v774, %s795
  %v797 = vpop.permute.xlu0 %796
  %s799 = sor.u32 256, 48
  %800 = vbcast.lane.b32.xlu0 %v774, %s799
  %v801 = vpop.permute.xlu0 %800
  %s803 = sor.u32 256, 56
  %804 = vbcast.lane.b32.xlu0 %v774, %s803
  %v805 = vpop.permute.xlu0 %804
  %v806 = vmul.f32 %v742, %v178
  %v807 = vmul.f32 %v746, %v181
  %v808 = vmul.f32 %v750, %v186
  %v809 = vmul.f32 %v754, %v189
  %v810 = vmul.f32 %v758, %v194
  %v811 = vmul.f32 %v762, %v197
  %v812 = vmul.f32 %v766, %v202
  %v813 = vmul.f32 %v770, %v205
  %v814 = vmul.f32 %v777, %v178
  %v815 = vmul.f32 %v781, %v181
  %v816 = vmul.f32 %v785, %v186
  %v817 = vmul.f32 %v789, %v189
  %v818 = vmul.f32 %v793, %v194
  %v819 = vmul.f32 %v797, %v197
  %v820 = vmul.f32 %v801, %v202
  %v821 = vmul.f32 %v805, %v205
  %v822 = vadd.f32 %v720, %v806
  %v823 = vadd.f32 %v721, %v807
  %v824 = vadd.f32 %v722, %v808
  %v825 = vadd.f32 %v723, %v809
  %v826 = vadd.f32 %v724, %v810
  %v827 = vadd.f32 %v725, %v811
  %v828 = vadd.f32 %v726, %v812
  %v829 = vadd.f32 %v727, %v813
  %v830 = vadd.f32 %v728, %v814
  %v831 = vadd.f32 %v729, %v815
  %v832 = vadd.f32 %v730, %v816
  %v833 = vadd.f32 %v731, %v817
  %v834 = vadd.f32 %v732, %v818
  %v835 = vadd.f32 %v733, %v819
  %v836 = vadd.f32 %v734, %v820
  %v837 = vadd.f32 %v735, %v821
  %v838 = vpack.c.bf16 %v823, %v822
  %v839 = vpack.c.bf16 %v825, %v824
  %v840 = vpack.c.bf16 %v827, %v826
  %v841 = vpack.c.bf16 %v829, %v828
  %v842 = vpack.c.bf16 %v831, %v830
  %v843 = vpack.c.bf16 %v833, %v832
  %v844 = vpack.c.bf16 %v835, %v834
  %v845 = vpack.c.bf16 %v837, %v836
  %854 = vrot.lane.b32.xlu0 %v838, 96
  %v855 = vpop.permute.xlu0 %854
  %856 = vrot.lane.b32.xlu0 %v839, 96
  %v857 = vpop.permute.xlu0 %856
  %858 = vrot.lane.b32.xlu0 %v840, 96
  %v859 = vpop.permute.xlu0 %858
  %860 = vrot.lane.b32.xlu0 %v841, 96
  %v861 = vpop.permute.xlu0 %860
  %862 = vrot.lane.b32.xlu0 %v842, 96
  %v863 = vpop.permute.xlu0 %862
  %864 = vrot.lane.b32.xlu0 %v843, 96
  %v865 = vpop.permute.xlu0 %864
  %866 = vrot.lane.b32.xlu0 %v844, 96
  %v867 = vpop.permute.xlu0 %866
  %868 = vrot.lane.b32.xlu0 %v845, 96
  %v869 = vpop.permute.xlu0 %868
  %v871 = vsel %vm86, %v60, %v855
  %v873 = vsel %vm86, %v61, %v857
  %v875 = vsel %vm86, %v62, %v859
  %v877 = vsel %vm86, %v63, %v861
  %v879 = vsel %vm86, %v64, %v863
  %v881 = vsel %vm86, %v65, %v865
  %v883 = vsel %vm86, %v66, %v867
  %v885 = vsel %vm86, %v67, %v869
  %v887 = vlaneseq
  %v888 = vshrl.u32 %v887, 7
  %v889 = vsub.s32 0, %v888
  %v890 = vrot.slane %v59, %v889
  %v900 = vunpack.c.l.b16 %v51
  %v901 = vunpack.c.l.b16 %v52
  %v902 = vunpack.c.l.b16 %v53
  %v903 = vunpack.c.l.b16 %v54
  %v904 = vunpack.c.l.b16 %v55
  %v905 = vunpack.c.l.b16 %v56
  %v906 = vunpack.c.l.b16 %v57
  %v907 = vunpack.c.l.b16 %v58
  %v908 = vpack.c.b16 %v901, %v900
  %v909 = vpack.c.b16 %v903, %v902
  %v910 = vpack.c.b16 %v905, %v904
  %v911 = vpack.c.b16 %v907, %v906
  %vm916 = vcmask 523264
  %v917 = vsel %vm916, %v871, 0
  %v919 = vsel %vm916, %v873, 0
  %v921 = vsel %vm916, %v875, 0
  %v923 = vsel %vm916, %v877, 0
  %v925 = vsel %vm916, %v879, 0
  %v927 = vsel %vm916, %v881, 0
  %v929 = vsel %vm916, %v883, 0
  %v931 = vsel %vm916, %v885, 0
  %933 = vmatprep.subr.bf16.mxu0 0
  %934 = vmatpush1.bf16.msra.mxu0 %v908
  %935 = vmatprep.subr.bf16.mxu0 0
  %936 = vmatpush1.bf16.msra.mxu0 %v909
  %937 = vmatprep.subr.bf16.mxu0 0
  %938 = vmatpush1.bf16.msra.mxu0 %v910
  %939 = vmatprep.subr.bf16.mxu0 0
  %940 = vmatpush1.bf16.msra.mxu0 %v911
  %941 = vmatprep.subr.bf16.mxu0 0
  %942 = vmatpush1.bf16.msra.mxu0 0
  %943 = vmatprep.subr.bf16.mxu0 0
  %944 = vmatpush1.bf16.msra.mxu0 0
  %945 = vmatprep.subr.bf16.mxu0 0
  %946 = vmatpush1.bf16.msra.mxu0 0
  %947 = vmatprep.subr.bf16.mxu0 0
  %948 = vmatpush1.bf16.msra.mxu0 0
  %949 = vmatprep.subr.bf16.mxu0 0
  %950 = vmatpush1.bf16.msra.mxu0 0
  %951 = vmatprep.subr.bf16.mxu0 0
  %952 = vmatpush1.bf16.msra.mxu0 0
  %953 = vmatprep.subr.bf16.mxu0 0
  %954 = vmatpush1.bf16.msra.mxu0 0
  %955 = vmatprep.subr.bf16.mxu0 0
  %956 = vmatpush1.bf16.msra.mxu0 0
  %957 = vmatprep.subr.bf16.mxu0 0
  %958 = vmatpush1.bf16.msra.mxu0 0
  %959 = vmatprep.subr.bf16.mxu0 0
  %960 = vmatpush1.bf16.msra.mxu0 0
  %961 = vmatprep.subr.bf16.mxu0 0
  %962 = vmatpush1.bf16.msra.mxu0 0
  %963 = vmatprep.subr.bf16.mxu0 0
  %964 = vmatpush1.bf16.msra.mxu0 0
  %965 = vmatprep.mubr.bf16.mxu0 0
  %966 = vmatmul.mubr.bf16.gmra.mrb[0].mxu0 %v917
  %v967 = vpop.f32.mrb[0].mxu0
  %v968 = vadd.f32 %v890, %v967
  %v969 = vpop.f32.mrb[0].mxu0
  %v970 = vpop.f32.mrb[0].mxu0
  %v971 = vadd.f32 %v890, %v970
  %v972 = vpop.f32.mrb[0].mxu0
  %973 = vmatprep.mubr.bf16.mxu0 0
  %974 = vmatmul.mubr.bf16.gmra.mrb[0].mxu0 %v919
  %v975 = vpop.f32.mrb[0].mxu0
  %v976 = vadd.f32 %v890, %v975
  %v977 = vpop.f32.mrb[0].mxu0
  %v978 = vpop.f32.mrb[0].mxu0
  %v979 = vadd.f32 %v890, %v978
  %v980 = vpop.f32.mrb[0].mxu0
  %981 = vmatprep.mubr.bf16.mxu0 0
  %982 = vmatmul.mubr.bf16.gmra.mrb[0].mxu0 %v921
  %v983 = vpop.f32.mrb[0].mxu0
  %v984 = vadd.f32 %v890, %v983
  %v985 = vpop.f32.mrb[0].mxu0
  %v986 = vpop.f32.mrb[0].mxu0
  %v987 = vadd.f32 %v890, %v986
  %v988 = vpop.f32.mrb[0].mxu0
  %989 = vmatprep.mubr.bf16.mxu0 0
  %990 = vmatmul.mubr.bf16.gmra.mrb[0].mxu0 %v923
  %v991 = vpop.f32.mrb[0].mxu0
  %v992 = vadd.f32 %v890, %v991
  %v993 = vpop.f32.mrb[0].mxu0
  %v994 = vpop.f32.mrb[0].mxu0
  %v995 = vadd.f32 %v890, %v994
  %v996 = vpop.f32.mrb[0].mxu0
  %997 = vmatprep.mubr.bf16.mxu0 0
  %998 = vmatmul.mubr.bf16.gmra.mrb[0].mxu0 %v925
  %v999 = vpop.f32.mrb[0].mxu0
  %v1000 = vadd.f32 %v890, %v999
  %v1001 = vpop.f32.mrb[0].mxu0
  %v1002 = vpop.f32.mrb[0].mxu0
  %v1003 = vadd.f32 %v890, %v1002
  %v1004 = vpop.f32.mrb[0].mxu0
  %1005 = vmatprep.mubr.bf16.mxu0 0
  %1006 = vmatmul.mubr.bf16.gmra.mrb[0].mxu0 %v927
  %v1007 = vpop.f32.mrb[0].mxu0
  %v1008 = vadd.f32 %v890, %v1007
  %v1009 = vpop.f32.mrb[0].mxu0
  %v1010 = vpop.f32.mrb[0].mxu0
  %v1011 = vadd.f32 %v890, %v1010
  %v1012 = vpop.f32.mrb[0].mxu0
  %1013 = vmatprep.mubr.bf16.mxu0 0
  %1014 = vmatmul.mubr.bf16.gmra.mrb[0].mxu0 %v929
  %v1015 = vpop.f32.mrb[0].mxu0
  %v1016 = vadd.f32 %v890, %v1015
  %v1017 = vpop.f32.mrb[0].mxu0
  %v1018 = vpop.f32.mrb[0].mxu0
  %v1019 = vadd.f32 %v890, %v1018
  %v1020 = vpop.f32.mrb[0].mxu0
  %1021 = vmatprep.mubr.bf16.mxu0 0
  %1022 = vmatmul.mubr.bf16.gmra.mrb[0].mxu0 %v931
  %v1023 = vpop.f32.mrb[0].mxu0
  %v1024 = vadd.f32 %v890, %v1023
  %v1025 = vpop.f32.mrb[0].mxu0
  %v1026 = vpop.f32.mrb[0].mxu0
  %v1027 = vadd.f32 %v890, %v1026
  %v1028 = vpop.f32.mrb[0].mxu0
  %1029 = vdwg.mxu0
  %v1030 = vsel %vm916, %v968, 0.0
  %v1031 = vsel %vm916, %v971, 0.0
  %v1032 = vadd.f32 %v1030, %v1031
  %v1033 = vsel %vm916, %v976, 0.0
  %v1034 = vadd.f32 %v1032, %v1033
  %v1035 = vsel %vm916, %v979, 0.0
  %v1036 = vadd.f32 %v1034, %v1035
  %v1037 = vsel %vm916, %v984, 0.0
  %v1038 = vadd.f32 %v1036, %v1037
  %v1039 = vsel %vm916, %v987, 0.0
  %v1040 = vadd.f32 %v1038, %v1039
  %v1041 = vsel %vm916, %v992, 0.0
  %v1042 = vadd.f32 %v1040, %v1041
  %v1043 = vsel %vm916, %v995, 0.0
  %v1044 = vadd.f32 %v1042, %v1043
  %v1045 = vrot.slane %v1044, 4
  %v1046 = vadd.f32 %v1044, %v1045
  %v1047 = vrot.slane %v1046, 2
  %v1048 = vadd.f32 %v1046, %v1047
  %v1049 = vrot.slane %v1048, 1
  %v1050 = vadd.f32 %v1048, %v1049
  %v1051 = vsel %vm916, %v1000, 0.0
  %v1052 = vsel %vm916, %v1003, 0.0
  %v1053 = vadd.f32 %v1051, %v1052
  %v1054 = vsel %vm916, %v1008, 0.0
  %v1055 = vadd.f32 %v1053, %v1054
  %v1056 = vsel %vm916, %v1011, 0.0
  %v1057 = vadd.f32 %v1055, %v1056
  %v1058 = vsel %vm916, %v1016, 0.0
  %v1059 = vadd.f32 %v1057, %v1058
  %v1060 = vsel %vm916, %v1019, 0.0
  %v1061 = vadd.f32 %v1059, %v1060
  %v1062 = vsel %vm916, %v1024, 0.0
  %v1063 = vadd.f32 %v1061, %v1062
  %v1064 = vsel %vm916, %v1027, 0.0
  %v1065 = vadd.f32 %v1063, %v1064
  %v1066 = vrot.slane %v1065, 4
  %v1067 = vadd.f32 %v1065, %v1066
  %v1068 = vrot.slane %v1067, 2
  %v1069 = vadd.f32 %v1067, %v1068
  %v1070 = vrot.slane %v1069, 1
  %v1071 = vadd.f32 %v1069, %v1070
  %v1072 = vrcp.pop 64.0
  %v1073 = vmul.f32 %v1050, %v1072
  %v1074 = vmul.f32 %v1071, %v1072
  %v1075 = vsub.f32 %v968, %v1073
  %v1076 = vsub.f32 %v971, %v1073
  %v1077 = vsub.f32 %v976, %v1073
  %v1078 = vsub.f32 %v979, %v1073
  %v1079 = vsub.f32 %v984, %v1073
  %v1080 = vsub.f32 %v987, %v1073
  %v1081 = vsub.f32 %v992, %v1073
  %v1082 = vsub.f32 %v995, %v1073
  %v1083 = vsub.f32 %v1000, %v1074
  %v1084 = vsub.f32 %v1003, %v1074
  %v1085 = vsub.f32 %v1008, %v1074
  %v1086 = vsub.f32 %v1011, %v1074
  %v1087 = vsub.f32 %v1016, %v1074
  %v1088 = vsub.f32 %v1019, %v1074
  %v1089 = vsub.f32 %v1024, %v1074
  %v1090 = vsub.f32 %v1027, %v1074
  %v1091 = vmul.f32 %v1075, %v1075
  %v1092 = vmul.f32 %v1076, %v1076
  %v1093 = vmul.f32 %v1077, %v1077
  %v1094 = vmul.f32 %v1078, %v1078
  %v1095 = vmul.f32 %v1079, %v1079
  %v1096 = vmul.f32 %v1080, %v1080
  %v1097 = vmul.f32 %v1081, %v1081
  %v1098 = vmul.f32 %v1082, %v1082
  %v1099 = vmul.f32 %v1083, %v1083
  %v1100 = vmul.f32 %v1084, %v1084
  %v1101 = vmul.f32 %v1085, %v1085
  %v1102 = vmul.f32 %v1086, %v1086
  %v1103 = vmul.f32 %v1087, %v1087
  %v1104 = vmul.f32 %v1088, %v1088
  %v1105 = vmul.f32 %v1089, %v1089
  %v1106 = vmul.f32 %v1090, %v1090
  %v1107 = vsel %vm916, %v1091, 0.0
  %v1108 = vsel %vm916, %v1092, 0.0
  %v1109 = vadd.f32 %v1107, %v1108
  %v1110 = vsel %vm916, %v1093, 0.0
  %v1111 = vadd.f32 %v1109, %v1110
  %v1112 = vsel %vm916, %v1094, 0.0
  %v1113 = vadd.f32 %v1111, %v1112
  %v1114 = vsel %vm916, %v1095, 0.0
  %v1115 = vadd.f32 %v1113, %v1114
  %v1116 = vsel %vm916, %v1096, 0.0
  %v1117 = vadd.f32 %v1115, %v1116
  %v1118 = vsel %vm916, %v1097, 0.0
  %v1119 = vadd.f32 %v1117, %v1118
  %v1120 = vsel %vm916, %v1098, 0.0
  %v1121 = vadd.f32 %v1119, %v1120
  %v1122 = vrot.slane %v1121, 4
  %v1123 = vadd.f32 %v1121, %v1122
  %v1124 = vrot.slane %v1123, 2
  %v1125 = vadd.f32 %v1123, %v1124
  %v1126 = vrot.slane %v1125, 1
  %v1127 = vadd.f32 %v1125, %v1126
  %v1128 = vsel %vm916, %v1099, 0.0
  %v1129 = vsel %vm916, %v1100, 0.0
  %v1130 = vadd.f32 %v1128, %v1129
  %v1131 = vsel %vm916, %v1101, 0.0
  %v1132 = vadd.f32 %v1130, %v1131
  %v1133 = vsel %vm916, %v1102, 0.0
  %v1134 = vadd.f32 %v1132, %v1133
  %v1135 = vsel %vm916, %v1103, 0.0
  %v1136 = vadd.f32 %v1134, %v1135
  %v1137 = vsel %vm916, %v1104, 0.0
  %v1138 = vadd.f32 %v1136, %v1137
  %v1139 = vsel %vm916, %v1105, 0.0
  %v1140 = vadd.f32 %v1138, %v1139
  %v1141 = vsel %vm916, %v1106, 0.0
  %v1142 = vadd.f32 %v1140, %v1141
  %v1143 = vrot.slane %v1142, 4
  %v1144 = vadd.f32 %v1142, %v1143
  %v1145 = vrot.slane %v1144, 2
  %v1146 = vadd.f32 %v1144, %v1145
  %v1147 = vrot.slane %v1146, 1
  %v1148 = vadd.f32 %v1146, %v1147
  %v1149 = vmul.f32 %v1127, %v1072
  %v1150 = vmul.f32 %v1148, %v1072
  %v1151 = vadd.f32 %v1149, 1e-05
  %v1152 = vadd.f32 %v1150, 1e-05
  %v1153 = vrsqrt.pop %v1151
  %v1154 = vrsqrt.pop %v1152
  %v1155 = vmul.f32 %v1075, %v1153
  %v1156 = vmul.f32 %v1076, %v1153
  %v1157 = vmul.f32 %v1077, %v1153
  %v1158 = vmul.f32 %v1078, %v1153
  %v1159 = vmul.f32 %v1079, %v1153
  %v1160 = vmul.f32 %v1080, %v1153
  %v1161 = vmul.f32 %v1081, %v1153
  %v1162 = vmul.f32 %v1082, %v1153
  %v1163 = vmul.f32 %v1083, %v1154
  %v1164 = vmul.f32 %v1084, %v1154
  %v1165 = vmul.f32 %v1085, %v1154
  %v1166 = vmul.f32 %v1086, %v1154
  %v1167 = vmul.f32 %v1087, %v1154
  %v1168 = vmul.f32 %v1088, %v1154
  %v1169 = vmul.f32 %v1089, %v1154
  %v1170 = vmul.f32 %v1090, %v1154
  %v1171 = vmax.f32 %v1155, 0.0
  %v1172 = vmax.f32 %v1156, 0.0
  %v1173 = vmax.f32 %v1157, 0.0
  %v1174 = vmax.f32 %v1158, 0.0
  %v1175 = vmax.f32 %v1159, 0.0
  %v1176 = vmax.f32 %v1160, 0.0
  %v1177 = vmax.f32 %v1161, 0.0
  %v1178 = vmax.f32 %v1162, 0.0
  %v1179 = vmax.f32 %v1163, 0.0
  %v1180 = vmax.f32 %v1164, 0.0
  %v1181 = vmax.f32 %v1165, 0.0
  %v1182 = vmax.f32 %v1166, 0.0
  %v1183 = vmax.f32 %v1167, 0.0
  %v1184 = vmax.f32 %v1168, 0.0
  %v1185 = vmax.f32 %v1169, 0.0
  %v1186 = vmax.f32 %v1170, 0.0
  %v1187 = vpack.c.bf16 %v1172, %v1171
  %v1188 = vpack.c.bf16 %v1174, %v1173
  %v1189 = vpack.c.bf16 %v1176, %v1175
  %v1190 = vpack.c.bf16 %v1178, %v1177
  %v1191 = vpack.c.bf16 %v1180, %v1179
  %v1192 = vpack.c.bf16 %v1182, %v1181
  %v1193 = vpack.c.bf16 %v1184, %v1183
  %v1194 = vpack.c.bf16 %v1186, %v1185
  %v1195 = vld [vmem:[%s6] sm:$0xf]
  %v1196 = vld [vmem:[%s6 + $0x4] sm:$0xf]
  %v1197 = vld [vmem:[%s6 + $0x8] sm:$0xf]
  %v1198 = vld [vmem:[%s6 + $0xc] sm:$0xf]
  %v1199 = vld [vmem:[%s6 + $0x10] sm:$0xf]
  %v1200 = vld [vmem:[%s6 + $0x14] sm:$0xf]
  %v1201 = vld [vmem:[%s6 + $0x18] sm:$0xf]
  %v1202 = vld [vmem:[%s6 + $0x1c] sm:$0xf]
  %v1203 = vld [vmem:[%s7] sm:$0x1]
  %v1205 = vlaneseq
  %v1206 = vshrl.u32 %v1205, 7
  %v1207 = vsub.s32 0, %v1206
  %v1208 = vrot.slane %v1203, %v1207
  %v1218 = vunpack.c.l.b16 %v1195
  %v1219 = vunpack.c.l.b16 %v1196
  %v1220 = vunpack.c.l.b16 %v1197
  %v1221 = vunpack.c.l.b16 %v1198
  %v1222 = vunpack.c.l.b16 %v1199
  %v1223 = vunpack.c.l.b16 %v1200
  %v1224 = vunpack.c.l.b16 %v1201
  %v1225 = vunpack.c.l.b16 %v1202
  %v1226 = vpack.c.b16 %v1219, %v1218
  %v1227 = vpack.c.b16 %v1221, %v1220
  %v1228 = vpack.c.b16 %v1223, %v1222
  %v1229 = vpack.c.b16 %v1225, %v1224
  %v1235 = vsel %vm916, %v1187, 0
  %v1238 = vsel %vm916, %v1188, 0
  %v1241 = vsel %vm916, %v1189, 0
  %v1244 = vsel %vm916, %v1190, 0
  %v1247 = vsel %vm916, %v1191, 0
  %v1250 = vsel %vm916, %v1192, 0
  %v1253 = vsel %vm916, %v1193, 0
  %v1256 = vsel %vm916, %v1194, 0
  %1258 = vmatprep.subr.bf16.mxu0 0
  %1259 = vmatpush1.bf16.msra.mxu0 %v1226
  %1260 = vmatprep.subr.bf16.mxu0 0
  %1261 = vmatpush1.bf16.msra.mxu0 %v1227
  %1262 = vmatprep.subr.bf16.mxu0 0
  %1263 = vmatpush1.bf16.msra.mxu0 %v1228
  %1264 = vmatprep.subr.bf16.mxu0 0
  %1265 = vmatpush1.bf16.msra.mxu0 %v1229
  %1266 = vmatprep.subr.bf16.mxu0 0
  %1267 = vmatpush1.bf16.msra.mxu0 0
  %1268 = vmatprep.subr.bf16.mxu0 0
  %1269 = vmatpush1.bf16.msra.mxu0 0
  %1270 = vmatprep.subr.bf16.mxu0 0
  %1271 = vmatpush1.bf16.msra.mxu0 0
  %1272 = vmatprep.subr.bf16.mxu0 0
  %1273 = vmatpush1.bf16.msra.mxu0 0
  %1274 = vmatprep.subr.bf16.mxu0 0
  %1275 = vmatpush1.bf16.msra.mxu0 0
  %1276 = vmatprep.subr.bf16.mxu0 0
  %1277 = vmatpush1.bf16.msra.mxu0 0
  %1278 = vmatprep.subr.bf16.mxu0 0
  %1279 = vmatpush1.bf16.msra.mxu0 0
  %1280 = vmatprep.subr.bf16.mxu0 0
  %1281 = vmatpush1.bf16.msra.mxu0 0
  %1282 = vmatprep.subr.bf16.mxu0 0
  %1283 = vmatpush1.bf16.msra.mxu0 0
  %1284 = vmatprep.subr.bf16.mxu0 0
  %1285 = vmatpush1.bf16.msra.mxu0 0
  %1286 = vmatprep.subr.bf16.mxu0 0
  %1287 = vmatpush1.bf16.msra.mxu0 0
  %1288 = vmatprep.subr.bf16.mxu0 0
  %1289 = vmatpush1.bf16.msra.mxu0 0
  %1290 = vmatprep.mubr.bf16.mxu0 0
  %1291 = vmatmul.mubr.bf16.gmra.mrb[0].mxu0 %v1235
  %v1292 = vpop.f32.mrb[0].mxu0
  %v1293 = vadd.f32 %v1208, %v1292
  %v1294 = vpop.f32.mrb[0].mxu0
  %v1295 = vpop.f32.mrb[0].mxu0
  %v1296 = vadd.f32 %v1208, %v1295
  %v1297 = vpop.f32.mrb[0].mxu0
  %1298 = vmatprep.mubr.bf16.mxu0 0
  %1299 = vmatmul.mubr.bf16.gmra.mrb[0].mxu0 %v1238
  %v1300 = vpop.f32.mrb[0].mxu0
  %v1301 = vadd.f32 %v1208, %v1300
  %v1302 = vpop.f32.mrb[0].mxu0
  %v1303 = vpop.f32.mrb[0].mxu0
  %v1304 = vadd.f32 %v1208, %v1303
  %v1305 = vpop.f32.mrb[0].mxu0
  %1306 = vmatprep.mubr.bf16.mxu0 0
  %1307 = vmatmul.mubr.bf16.gmra.mrb[0].mxu0 %v1241
  %v1308 = vpop.f32.mrb[0].mxu0
  %v1309 = vadd.f32 %v1208, %v1308
  %v1310 = vpop.f32.mrb[0].mxu0
  %v1311 = vpop.f32.mrb[0].mxu0
  %v1312 = vadd.f32 %v1208, %v1311
  %v1313 = vpop.f32.mrb[0].mxu0
  %1314 = vmatprep.mubr.bf16.mxu0 0
  %1315 = vmatmul.mubr.bf16.gmra.mrb[0].mxu0 %v1244
  %v1316 = vpop.f32.mrb[0].mxu0
  %v1317 = vadd.f32 %v1208, %v1316
  %v1318 = vpop.f32.mrb[0].mxu0
  %v1319 = vpop.f32.mrb[0].mxu0
  %v1320 = vadd.f32 %v1208, %v1319
  %v1321 = vpop.f32.mrb[0].mxu0
  %1322 = vmatprep.mubr.bf16.mxu0 0
  %1323 = vmatmul.mubr.bf16.gmra.mrb[0].mxu0 %v1247
  %v1324 = vpop.f32.mrb[0].mxu0
  %v1325 = vadd.f32 %v1208, %v1324
  %v1326 = vpop.f32.mrb[0].mxu0
  %v1327 = vpop.f32.mrb[0].mxu0
  %v1328 = vadd.f32 %v1208, %v1327
  %v1329 = vpop.f32.mrb[0].mxu0
  %1330 = vmatprep.mubr.bf16.mxu0 0
  %1331 = vmatmul.mubr.bf16.gmra.mrb[0].mxu0 %v1250
  %v1332 = vpop.f32.mrb[0].mxu0
  %v1333 = vadd.f32 %v1208, %v1332
  %v1334 = vpop.f32.mrb[0].mxu0
  %v1335 = vpop.f32.mrb[0].mxu0
  %v1336 = vadd.f32 %v1208, %v1335
  %v1337 = vpop.f32.mrb[0].mxu0
  %1338 = vmatprep.mubr.bf16.mxu0 0
  %1339 = vmatmul.mubr.bf16.gmra.mrb[0].mxu0 %v1253
  %v1340 = vpop.f32.mrb[0].mxu0
  %v1341 = vadd.f32 %v1208, %v1340
  %v1342 = vpop.f32.mrb[0].mxu0
  %v1343 = vpop.f32.mrb[0].mxu0
  %v1344 = vadd.f32 %v1208, %v1343
  %v1345 = vpop.f32.mrb[0].mxu0
  %1346 = vmatprep.mubr.bf16.mxu0 0
  %1347 = vmatmul.mubr.bf16.gmra.mrb[0].mxu0 %v1256
  %v1348 = vpop.f32.mrb[0].mxu0
  %v1349 = vadd.f32 %v1208, %v1348
  %v1350 = vpop.f32.mrb[0].mxu0
  %v1351 = vpop.f32.mrb[0].mxu0
  %v1352 = vadd.f32 %v1208, %v1351
  %v1353 = vpop.f32.mrb[0].mxu0
  %1354 = vdwg.mxu0
  %v1355 = vsel %vm86, %v1293, 0.0
  %v1356 = vsel %vm86, %v1296, 0.0
  %v1357 = vadd.f32 %v1355, %v1356
  %v1358 = vsel %vm86, %v1301, 0.0
  %v1359 = vadd.f32 %v1357, %v1358
  %v1360 = vsel %vm86, %v1304, 0.0
  %v1361 = vadd.f32 %v1359, %v1360
  %v1362 = vsel %vm86, %v1309, 0.0
  %v1363 = vadd.f32 %v1361, %v1362
  %v1364 = vsel %vm86, %v1312, 0.0
  %v1365 = vadd.f32 %v1363, %v1364
  %v1366 = vsel %vm86, %v1317, 0.0
  %v1367 = vadd.f32 %v1365, %v1366
  %v1368 = vsel %vm86, %v1320, 0.0
  %v1369 = vadd.f32 %v1367, %v1368
  %v1370 = vrot.slane %v1369, 4
  %v1371 = vadd.f32 %v1369, %v1370
  %v1372 = vrot.slane %v1371, 2
  %v1373 = vadd.f32 %v1371, %v1372
  %v1374 = vrot.slane %v1373, 1
  %v1375 = vadd.f32 %v1373, %v1374
  %v1376 = vsel %vm86, %v1325, 0.0
  %v1377 = vsel %vm86, %v1328, 0.0
  %v1378 = vadd.f32 %v1376, %v1377
  %v1379 = vsel %vm86, %v1333, 0.0
  %v1380 = vadd.f32 %v1378, %v1379
  %v1381 = vsel %vm86, %v1336, 0.0
  %v1382 = vadd.f32 %v1380, %v1381
  %v1383 = vsel %vm86, %v1341, 0.0
  %v1384 = vadd.f32 %v1382, %v1383
  %v1385 = vsel %vm86, %v1344, 0.0
  %v1386 = vadd.f32 %v1384, %v1385
  %v1387 = vsel %vm86, %v1349, 0.0
  %v1388 = vadd.f32 %v1386, %v1387
  %v1389 = vsel %vm86, %v1352, 0.0
  %v1390 = vadd.f32 %v1388, %v1389
  %v1391 = vrot.slane %v1390, 4
  %v1392 = vadd.f32 %v1390, %v1391
  %v1393 = vrot.slane %v1392, 2
  %v1394 = vadd.f32 %v1392, %v1393
  %v1395 = vrot.slane %v1394, 1
  %v1396 = vadd.f32 %v1394, %v1395
  %v1397 = vmul.f32 %v1375, %v1072
  %v1398 = vmul.f32 %v1396, %v1072
  %v1399 = vsub.f32 %v1293, %v1397
  %v1400 = vsub.f32 %v1296, %v1397
  %v1401 = vsub.f32 %v1301, %v1397
  %v1402 = vsub.f32 %v1304, %v1397
  %v1403 = vsub.f32 %v1309, %v1397
  %v1404 = vsub.f32 %v1312, %v1397
  %v1405 = vsub.f32 %v1317, %v1397
  %v1406 = vsub.f32 %v1320, %v1397
  %v1407 = vsub.f32 %v1325, %v1398
  %v1408 = vsub.f32 %v1328, %v1398
  %v1409 = vsub.f32 %v1333, %v1398
  %v1410 = vsub.f32 %v1336, %v1398
  %v1411 = vsub.f32 %v1341, %v1398
  %v1412 = vsub.f32 %v1344, %v1398
  %v1413 = vsub.f32 %v1349, %v1398
  %v1414 = vsub.f32 %v1352, %v1398
  %v1415 = vmul.f32 %v1399, %v1399
  %v1416 = vmul.f32 %v1400, %v1400
  %v1417 = vmul.f32 %v1401, %v1401
  %v1418 = vmul.f32 %v1402, %v1402
  %v1419 = vmul.f32 %v1403, %v1403
  %v1420 = vmul.f32 %v1404, %v1404
  %v1421 = vmul.f32 %v1405, %v1405
  %v1422 = vmul.f32 %v1406, %v1406
  %v1423 = vmul.f32 %v1407, %v1407
  %v1424 = vmul.f32 %v1408, %v1408
  %v1425 = vmul.f32 %v1409, %v1409
  %v1426 = vmul.f32 %v1410, %v1410
  %v1427 = vmul.f32 %v1411, %v1411
  %v1428 = vmul.f32 %v1412, %v1412
  %v1429 = vmul.f32 %v1413, %v1413
  %v1430 = vmul.f32 %v1414, %v1414
  %v1431 = vsel %vm86, %v1415, 0.0
  %v1432 = vsel %vm86, %v1416, 0.0
  %v1433 = vadd.f32 %v1431, %v1432
  %v1434 = vsel %vm86, %v1417, 0.0
  %v1435 = vadd.f32 %v1433, %v1434
  %v1436 = vsel %vm86, %v1418, 0.0
  %v1437 = vadd.f32 %v1435, %v1436
  %v1438 = vsel %vm86, %v1419, 0.0
  %v1439 = vadd.f32 %v1437, %v1438
  %v1440 = vsel %vm86, %v1420, 0.0
  %v1441 = vadd.f32 %v1439, %v1440
  %v1442 = vsel %vm86, %v1421, 0.0
  %v1443 = vadd.f32 %v1441, %v1442
  %v1444 = vsel %vm86, %v1422, 0.0
  %v1445 = vadd.f32 %v1443, %v1444
  %v1446 = vrot.slane %v1445, 4
  %v1447 = vadd.f32 %v1445, %v1446
  %v1448 = vrot.slane %v1447, 2
  %v1449 = vadd.f32 %v1447, %v1448
  %v1450 = vrot.slane %v1449, 1
  %v1451 = vadd.f32 %v1449, %v1450
  %v1452 = vsel %vm86, %v1423, 0.0
  %v1453 = vsel %vm86, %v1424, 0.0
  %v1454 = vadd.f32 %v1452, %v1453
  %v1455 = vsel %vm86, %v1425, 0.0
  %v1456 = vadd.f32 %v1454, %v1455
  %v1457 = vsel %vm86, %v1426, 0.0
  %v1458 = vadd.f32 %v1456, %v1457
  %v1459 = vsel %vm86, %v1427, 0.0
  %v1460 = vadd.f32 %v1458, %v1459
  %v1461 = vsel %vm86, %v1428, 0.0
  %v1462 = vadd.f32 %v1460, %v1461
  %v1463 = vsel %vm86, %v1429, 0.0
  %v1464 = vadd.f32 %v1462, %v1463
  %v1465 = vsel %vm86, %v1430, 0.0
  %v1466 = vadd.f32 %v1464, %v1465
  %v1467 = vrot.slane %v1466, 4
  %v1468 = vadd.f32 %v1466, %v1467
  %v1469 = vrot.slane %v1468, 2
  %v1470 = vadd.f32 %v1468, %v1469
  %v1471 = vrot.slane %v1470, 1
  %v1472 = vadd.f32 %v1470, %v1471
  %v1473 = vmul.f32 %v1451, %v1072
  %v1474 = vmul.f32 %v1472, %v1072
  %v1475 = vadd.f32 %v1473, 1e-05
  %v1476 = vadd.f32 %v1474, 1e-05
  %v1477 = vrsqrt.pop %v1475
  %v1478 = vrsqrt.pop %v1476
  %v1479 = vmul.f32 %v1399, %v1477
  %v1480 = vmul.f32 %v1400, %v1477
  %v1481 = vmul.f32 %v1401, %v1477
  %v1482 = vmul.f32 %v1402, %v1477
  %v1483 = vmul.f32 %v1403, %v1477
  %v1484 = vmul.f32 %v1404, %v1477
  %v1485 = vmul.f32 %v1405, %v1477
  %v1486 = vmul.f32 %v1406, %v1477
  %v1487 = vmul.f32 %v1407, %v1478
  %v1488 = vmul.f32 %v1408, %v1478
  %v1489 = vmul.f32 %v1409, %v1478
  %v1490 = vmul.f32 %v1410, %v1478
  %v1491 = vmul.f32 %v1411, %v1478
  %v1492 = vmul.f32 %v1412, %v1478
  %v1493 = vmul.f32 %v1413, %v1478
  %v1494 = vmul.f32 %v1414, %v1478
  %v1495 = vmax.f32 %v1479, 0.0
  %v1496 = vmax.f32 %v1480, 0.0
  %v1497 = vmax.f32 %v1481, 0.0
  %v1498 = vmax.f32 %v1482, 0.0
  %v1499 = vmax.f32 %v1483, 0.0
  %v1500 = vmax.f32 %v1484, 0.0
  %v1501 = vmax.f32 %v1485, 0.0
  %v1502 = vmax.f32 %v1486, 0.0
  %v1503 = vmax.f32 %v1487, 0.0
  %v1504 = vmax.f32 %v1488, 0.0
  %v1505 = vmax.f32 %v1489, 0.0
  %v1506 = vmax.f32 %v1490, 0.0
  %v1507 = vmax.f32 %v1491, 0.0
  %v1508 = vmax.f32 %v1492, 0.0
  %v1509 = vmax.f32 %v1493, 0.0
  %v1510 = vmax.f32 %v1494, 0.0
  %v1511 = vld [vmem:[%s1] sm:$0xff]
  %v1512 = vld [vmem:[%s1 + $0x8] sm:$0xff]
  %v1513 = vld [vmem:[%s1 + $0x10] sm:$0xff]
  %v1514 = vld [vmem:[%s1 + $0x18] sm:$0xff]
  %v1515 = vld [vmem:[%s1 + $0x20] sm:$0xff]
  %v1516 = vld [vmem:[%s1 + $0x28] sm:$0xff]
  %v1517 = vld [vmem:[%s1 + $0x30] sm:$0xff]
  %v1518 = vld [vmem:[%s1 + $0x38] sm:$0xff]
  %v1519 = vld [vmem:[%s1 + $0x40] sm:$0xff]
  %v1520 = vld [vmem:[%s1 + $0x48] sm:$0xff]
  %v1521 = vld [vmem:[%s1 + $0x50] sm:$0xff]
  %v1522 = vld [vmem:[%s1 + $0x58] sm:$0xff]
  %v1523 = vld [vmem:[%s1 + $0x60] sm:$0xff]
  %v1524 = vld [vmem:[%s1 + $0x68] sm:$0xff]
  %v1525 = vld [vmem:[%s1 + $0x70] sm:$0xff]
  %v1526 = vld [vmem:[%s1 + $0x78] sm:$0xff]
  %v1527 = vadd.f32 %v1511, %v1495
  %v1528 = vadd.f32 %v1512, %v1496
  %v1529 = vadd.f32 %v1513, %v1497
  %v1530 = vadd.f32 %v1514, %v1498
  %v1531 = vadd.f32 %v1515, %v1499
  %v1532 = vadd.f32 %v1516, %v1500
  %v1533 = vadd.f32 %v1517, %v1501
  %v1534 = vadd.f32 %v1518, %v1502
  %v1535 = vadd.f32 %v1519, %v1503
  %v1536 = vadd.f32 %v1520, %v1504
  %v1537 = vadd.f32 %v1521, %v1505
  %v1538 = vadd.f32 %v1522, %v1506
  %v1539 = vadd.f32 %v1523, %v1507
  %v1540 = vadd.f32 %v1524, %v1508
  %v1541 = vadd.f32 %v1525, %v1509
  %v1542 = vadd.f32 %v1526, %v1510
  %1543 = vst.msk [vmem:[%s8] sm:$0xff] %vm86, %v1527
  %1544 = vst.msk [vmem:[%s8 + $0x8] sm:$0xff] %vm86, %v1528
  %1545 = vst.msk [vmem:[%s8 + $0x10] sm:$0xff] %vm86, %v1529
  %1546 = vst.msk [vmem:[%s8 + $0x18] sm:$0xff] %vm86, %v1530
  %1547 = vst.msk [vmem:[%s8 + $0x20] sm:$0xff] %vm86, %v1531
  %1548 = vst.msk [vmem:[%s8 + $0x28] sm:$0xff] %vm86, %v1532
  %1549 = vst.msk [vmem:[%s8 + $0x30] sm:$0xff] %vm86, %v1533
  %1550 = vst.msk [vmem:[%s8 + $0x38] sm:$0xff] %vm86, %v1534
  %1551 = vst.msk [vmem:[%s8 + $0x40] sm:$0xff] %vm86, %v1535
  %1552 = vst.msk [vmem:[%s8 + $0x48] sm:$0xff] %vm86, %v1536
  %1553 = vst.msk [vmem:[%s8 + $0x50] sm:$0xff] %vm86, %v1537
  %1554 = vst.msk [vmem:[%s8 + $0x58] sm:$0xff] %vm86, %v1538
  %1555 = vst.msk [vmem:[%s8 + $0x60] sm:$0xff] %vm86, %v1539
  %1556 = vst.msk [vmem:[%s8 + $0x68] sm:$0xff] %vm86, %v1540
  %1557 = vst.msk [vmem:[%s8 + $0x70] sm:$0xff] %vm86, %v1541
  %1558 = vst.msk [vmem:[%s8 + $0x78] sm:$0xff] %vm86, %v1542
  // Predicated region
  $region34: #{attention_block_forward.1} parent=0 // pred_check
    _
  $region35: #{attention_block_forward.1} parent=0 // pred_check_branch
    %1560 = sbr.rel (0) target = $region37
  $region36: #{attention_block_forward.1} parent=0 // pred_region
    _
  $region37: #{attention_block_forward.1} parent=0 // pred_fallthru
    _
  // Predicated region
  $region38: #{attention_block_forward.1} parent=0 // pred_check
    _
  $region39: #{attention_block_forward.1} parent=0 // pred_check_branch
    %1562 = sbr.rel (0) target = $region41
  $region40: #{attention_block_forward.1} parent=0 // pred_region
    _
  $region41: #{attention_block_forward.1} parent=0 // pred_fallthru
    _

</llo_original>
